<compile_context>
chip_gen: v5e
topology: v5e:2x2
jax: 0.10.0
libtpu: 0.0.40
codegen_flags: <defaults>
</compile_context>

<pallas_src>
import functools

import jax
import jax.numpy as jnp
from jax.experimental import pallas as pl
from jax.experimental.pallas import tpu as pltpu


def _adaptive_max_pool_kernel(x_ref, o_ref, *, in_h, in_w, out_h, out_w):
    """x_ref: (1, H, W, cT) VMEM block; o_ref: (1, out_h, out_w, cT)."""
    rows = []
    for i in range(out_h):
        hs = (i * in_h) // out_h
        he = -(-((i + 1) * in_h) // out_h)  # ceil division
        cols = []
        for j in range(out_w):
            ws = (j * in_w) // out_w
            we = -(-((j + 1) * in_w) // out_w)
            # Load only this adaptive window from the Ref (static slice = free
            # view, only window-sized data reaches vregs).
            win = x_ref[0, hs:he, ws:we, :]                     # (kh, kw, cT)
            # Reduce over the window; channels stay on lanes (VPU + cheap
            # sublane reduce, no cross-lane work).
            cols.append(jnp.max(win, axis=(0, 1), keepdims=True))  # (1, 1, cT)
        rows.append(jnp.concatenate(cols, axis=1))              # (1, out_w, cT)
    tile = jnp.concatenate(rows, axis=0)                        # (out_h, out_w, cT)
    o_ref[0] = tile  # single lane-dense store for the whole block


def _pick_channel_tile(C, H, W, itemsize, budget_bytes=6 << 20):
    """Channel tile so a double-buffered input block fits scoped VMEM."""
    per_channel = H * W * itemsize
    if C * per_channel <= budget_bytes:
        return C  # whole channel dim in one block (always a legal last dim)
    # When tiling, the last block dim must be a multiple of 128 (lane rule).
    ct = (budget_bytes // per_channel) // 128 * 128
    return max(int(ct), 128)


def _adaptive_max_pool_nhwc(x, size, channel_tile=None):
    N, H, W, C = x.shape
    out_h, out_w = size
    itemsize = jnp.dtype(x.dtype).itemsize

    ct = channel_tile if channel_tile is not None else _pick_channel_tile(
        C, H, W, itemsize)
    grid = (N, pl.cdiv(C, ct))

    kernel = functools.partial(
        _adaptive_max_pool_kernel, in_h=H, in_w=W, out_h=out_h, out_w=out_w)

    cost = pl.CostEstimate(
        flops=N * C * H * W,  # ~one compare per input element
        transcendentals=0,
        bytes_accessed=N * C * H * W * itemsize
        + N * C * out_h * out_w * itemsize,
    )

    return pl.pallas_call(
        kernel,
        out_shape=jax.ShapeDtypeStruct((N, out_h, out_w, C), x.dtype),
        grid=grid,
        in_specs=[pl.BlockSpec((1, H, W, ct), lambda n, c: (n, 0, 0, c))],
        out_specs=pl.BlockSpec((1, out_h, out_w, ct), lambda n, c: (n, 0, 0, c)),
        compiler_params=pltpu.CompilerParams(
            dimension_semantics=("parallel", "parallel")),
        cost_estimate=cost,
    )(x)


def roi_pool(feature_maps, size, *, data_format="NCHW", channel_tile=None):
    """Adaptive max pool (ROI_Pool forward).

    feature_maps: (N, C, H, W) if data_format="NCHW" (PyTorch contract), or
                  (N, H, W, C) if data_format="NHWC" (no transpose overhead).
    size: (out_h, out_w).
    """
    assert feature_maps.ndim == 4, "Expected 4D input of (N, C, H, W)"
    assert len(size) == 2, "size must be (height, width)"
    assert data_format in ("NCHW", "NHWC")
    out_h, out_w = size

    if data_format == "NCHW":
        x_nhwc = jnp.transpose(feature_maps, (0, 2, 3, 1))
    else:
        x_nhwc = feature_maps

    out_nhwc = _adaptive_max_pool_nhwc(x_nhwc, (out_h, out_w), channel_tile)

    if data_format == "NCHW":
        return jnp.transpose(out_nhwc, (0, 3, 1, 2))
    return out_nhwc


def _reference_adaptive_max_pool(x, size):
    """Pure-JAX reference (NCHW in / NCHW out), matches AdaptiveMaxPool2d."""
    N, C, H, W = x.shape
    out_h, out_w = size
    rows = []
    for i in range(out_h):
        hs, he = (i * H) // out_h, -(-((i + 1) * H) // out_h)
        cols = []
        for j in range(out_w):
            ws, we = (j * W) // out_w, -(-((j + 1) * W) // out_w)
            cols.append(jnp.max(x[:, :, hs:he, ws:we], axis=(2, 3)))
        rows.append(jnp.stack(cols, axis=-1))
    return jnp.stack(rows, axis=-2)


if __name__ == "__main__":
    key = jax.random.PRNGKey(0)

    # Case 1: ragged adaptive windows (16 -> 7), NCHW API as in the module.
    x1 = jax.random.normal(key, (2, 4, 16, 16), dtype=jnp.float32)
    out1 = jax.block_until_ready(roi_pool(x1, (7, 7)))
    ref1 = _reference_adaptive_max_pool(x1, (7, 7))
    assert out1.shape == (2, 4, 7, 7), out1.shape
    assert jnp.allclose(out1, ref1), "mismatch vs reference (7,7) pool"

    # Case 2: evenly divisible windows (16 -> 4).
    x2 = jax.random.normal(jax.random.fold_in(key, 2), (2, 4, 16, 16),
                           dtype=jnp.float32)
    out2 = jax.block_until_ready(roi_pool(x2, (4, 4)))
    ref2 = _reference_adaptive_max_pool(x2, (4, 4))
    assert jnp.allclose(out2, ref2), "mismatch vs reference (4,4) pool"

    # Case 3: NHWC fast path (no wrapper transpose) + channel tiling path.
    x3 = jax.random.normal(jax.random.fold_in(key, 3), (1, 8, 8, 256),
                           dtype=jnp.float32)
    out3 = jax.block_until_ready(
        roi_pool(x3, (3, 3), data_format="NHWC", channel_tile=128))
    ref3 = jnp.transpose(
        _reference_adaptive_max_pool(jnp.transpose(x3, (0, 3, 1, 2)), (3, 3)),
        (0, 2, 3, 1))
    assert jnp.allclose(out3, ref3), "mismatch vs reference NHWC/tiled pool"

    print("KERNEL_OK")
</pallas_src>

<mosaic_0001>
module attributes {stable_mosaic.version = 11 : i64} {
  func.func @_adaptive_max_pool_kernel(%arg0: i32, %arg1: i32, %arg2: memref<1x16x16x4xf32, #tpu.memory_space<vmem>>, %arg3: memref<1x7x7x4xf32, #tpu.memory_space<vmem>>) attributes {dimension_semantics = [#tpu.dimension_semantics<parallel>, #tpu.dimension_semantics<parallel>], iteration_bounds = array<i64: 2, 1>, scalar_prefetch = 0 : i64, scratch_operands = 0 : i64, tpu.core_type = #tpu.core_type<tc>, window_params = [{transform_indices = @transform_0, window_bounds = array<i64: 1, 16, 16, 4>}, {transform_indices = @transform_1, window_bounds = array<i64: 1, 7, 7, 4>}]} {
    %c0 = arith.constant 0 : index
    %c0_0 = arith.constant 0 : index
    %c0_1 = arith.constant 0 : index
    %c0_2 = arith.constant 0 : index
    %0 = vector.load %arg2[%c0, %c0_0, %c0_1, %c0_2] : memref<1x16x16x4xf32, #tpu.memory_space<vmem>>, vector<1x3x3x4xf32>
    %1 = vector.shape_cast %0 : vector<1x3x3x4xf32> to vector<3x3x4xf32>
    %cst = arith.constant dense<0xFF800000> : vector<4xf32>
    %2 = vector.multi_reduction <maximumf>, %1, %cst [0, 1] : vector<3x3x4xf32> to vector<4xf32>
    %3 = vector.shape_cast %2 : vector<4xf32> to vector<1x1x4xf32>
    %c0_3 = arith.constant 0 : index
    %c0_4 = arith.constant 0 : index
    %c2 = arith.constant 2 : index
    %c0_5 = arith.constant 0 : index
    %4 = vector.load %arg2[%c0_3, %c0_4, %c2, %c0_5] : memref<1x16x16x4xf32, #tpu.memory_space<vmem>>, vector<1x3x3x4xf32>
    %5 = vector.shape_cast %4 : vector<1x3x3x4xf32> to vector<3x3x4xf32>
    %cst_6 = arith.constant dense<0xFF800000> : vector<4xf32>
    %6 = vector.multi_reduction <maximumf>, %5, %cst_6 [0, 1] : vector<3x3x4xf32> to vector<4xf32>
    %7 = vector.shape_cast %6 : vector<4xf32> to vector<1x1x4xf32>
    %c0_7 = arith.constant 0 : index
    %c0_8 = arith.constant 0 : index
    %c4 = arith.constant 4 : index
    %c0_9 = arith.constant 0 : index
    %8 = vector.load %arg2[%c0_7, %c0_8, %c4, %c0_9] : memref<1x16x16x4xf32, #tpu.memory_space<vmem>>, vector<1x3x3x4xf32>
    %9 = vector.shape_cast %8 : vector<1x3x3x4xf32> to vector<3x3x4xf32>
    %cst_10 = arith.constant dense<0xFF800000> : vector<4xf32>
    %10 = vector.multi_reduction <maximumf>, %9, %cst_10 [0, 1] : vector<3x3x4xf32> to vector<4xf32>
    %11 = vector.shape_cast %10 : vector<4xf32> to vector<1x1x4xf32>
    %c0_11 = arith.constant 0 : index
    %c0_12 = arith.constant 0 : index
    %c6 = arith.constant 6 : index
    %c0_13 = arith.constant 0 : index
    %12 = vector.load %arg2[%c0_11, %c0_12, %c6, %c0_13] : memref<1x16x16x4xf32, #tpu.memory_space<vmem>>, vector<1x3x4x4xf32>
    %13 = vector.shape_cast %12 : vector<1x3x4x4xf32> to vector<3x4x4xf32>
    %cst_14 = arith.constant dense<0xFF800000> : vector<4xf32>
    %14 = vector.multi_reduction <maximumf>, %13, %cst_14 [0, 1] : vector<3x4x4xf32> to vector<4xf32>
    %15 = vector.shape_cast %14 : vector<4xf32> to vector<1x1x4xf32>
    %c0_15 = arith.constant 0 : index
    %c0_16 = arith.constant 0 : index
    %c9 = arith.constant 9 : index
    %c0_17 = arith.constant 0 : index
    %16 = vector.load %arg2[%c0_15, %c0_16, %c9, %c0_17] : memref<1x16x16x4xf32, #tpu.memory_space<vmem>>, vector<1x3x3x4xf32>
    %17 = vector.shape_cast %16 : vector<1x3x3x4xf32> to vector<3x3x4xf32>
    %cst_18 = arith.constant dense<0xFF800000> : vector<4xf32>
    %18 = vector.multi_reduction <maximumf>, %17, %cst_18 [0, 1] : vector<3x3x4xf32> to vector<4xf32>
    %19 = vector.shape_cast %18 : vector<4xf32> to vector<1x1x4xf32>
    %c0_19 = arith.constant 0 : index
    %c0_20 = arith.constant 0 : index
    %c11 = arith.constant 11 : index
    %c0_21 = arith.constant 0 : index
    %20 = vector.load %arg2[%c0_19, %c0_20, %c11, %c0_21] : memref<1x16x16x4xf32, #tpu.memory_space<vmem>>, vector<1x3x3x4xf32>
    %21 = vector.shape_cast %20 : vector<1x3x3x4xf32> to vector<3x3x4xf32>
    %cst_22 = arith.constant dense<0xFF800000> : vector<4xf32>
    %22 = vector.multi_reduction <maximumf>, %21, %cst_22 [0, 1] : vector<3x3x4xf32> to vector<4xf32>
    %23 = vector.shape_cast %22 : vector<4xf32> to vector<1x1x4xf32>
    %c0_23 = arith.constant 0 : index
    %c0_24 = arith.constant 0 : index
    %c13 = arith.constant 13 : index
    %c0_25 = arith.constant 0 : index
    %24 = vector.load %arg2[%c0_23, %c0_24, %c13, %c0_25] : memref<1x16x16x4xf32, #tpu.memory_space<vmem>>, vector<1x3x3x4xf32>
    %25 = vector.shape_cast %24 : vector<1x3x3x4xf32> to vector<3x3x4xf32>
    %cst_26 = arith.constant dense<0xFF800000> : vector<4xf32>
    %26 = vector.multi_reduction <maximumf>, %25, %cst_26 [0, 1] : vector<3x3x4xf32> to vector<4xf32>
    %27 = vector.shape_cast %26 : vector<4xf32> to vector<1x1x4xf32>
    %28 = tpu.concatenate %3, %7, %11, %15, %19, %23, %27 in 1 : vector<1x1x4xf32>, vector<1x1x4xf32>, vector<1x1x4xf32>, vector<1x1x4xf32>, vector<1x1x4xf32>, vector<1x1x4xf32>, vector<1x1x4xf32> -> vector<1x7x4xf32>
    %c0_27 = arith.constant 0 : index
    %c2_28 = arith.constant 2 : index
    %c0_29 = arith.constant 0 : index
    %c0_30 = arith.constant 0 : index
    %29 = vector.load %arg2[%c0_27, %c2_28, %c0_29, %c0_30] : memref<1x16x16x4xf32, #tpu.memory_space<vmem>>, vector<1x3x3x4xf32>
    %30 = vector.shape_cast %29 : vector<1x3x3x4xf32> to vector<3x3x4xf32>
    %cst_31 = arith.constant dense<0xFF800000> : vector<4xf32>
    %31 = vector.multi_reduction <maximumf>, %30, %cst_31 [0, 1] : vector<3x3x4xf32> to vector<4xf32>
    %32 = vector.shape_cast %31 : vector<4xf32> to vector<1x1x4xf32>
    %c0_32 = arith.constant 0 : index
    %c2_33 = arith.constant 2 : index
    %c2_34 = arith.constant 2 : index
    %c0_35 = arith.constant 0 : index
    %33 = vector.load %arg2[%c0_32, %c2_33, %c2_34, %c0_35] : memref<1x16x16x4xf32, #tpu.memory_space<vmem>>, vector<1x3x3x4xf32>
    %34 = vector.shape_cast %33 : vector<1x3x3x4xf32> to vector<3x3x4xf32>
    %cst_36 = arith.constant dense<0xFF800000> : vector<4xf32>
    %35 = vector.multi_reduction <maximumf>, %34, %cst_36 [0, 1] : vector<3x3x4xf32> to vector<4xf32>
    %36 = vector.shape_cast %35 : vector<4xf32> to vector<1x1x4xf32>
    %c0_37 = arith.constant 0 : index
    %c2_38 = arith.constant 2 : index
    %c4_39 = arith.constant 4 : index
    %c0_40 = arith.constant 0 : index
    %37 = vector.load %arg2[%c0_37, %c2_38, %c4_39, %c0_40] : memref<1x16x16x4xf32, #tpu.memory_space<vmem>>, vector<1x3x3x4xf32>
    %38 = vector.shape_cast %37 : vector<1x3x3x4xf32> to vector<3x3x4xf32>
    %cst_41 = arith.constant dense<0xFF800000> : vector<4xf32>
    %39 = vector.multi_reduction <maximumf>, %38, %cst_41 [0, 1] : vector<3x3x4xf32> to vector<4xf32>
    %40 = vector.shape_cast %39 : vector<4xf32> to vector<1x1x4xf32>
    %c0_42 = arith.constant 0 : index
    %c2_43 = arith.constant 2 : index
    %c6_44 = arith.constant 6 : index
    %c0_45 = arith.constant 0 : index
    %41 = vector.load %arg2[%c0_42, %c2_43, %c6_44, %c0_45] : memref<1x16x16x4xf32, #tpu.memory_space<vmem>>, vector<1x3x4x4xf32>
    %42 = vector.shape_cast %41 : vector<1x3x4x4xf32> to vector<3x4x4xf32>
    %cst_46 = arith.constant dense<0xFF800000> : vector<4xf32>
    %43 = vector.multi_reduction <maximumf>, %42, %cst_46 [0, 1] : vector<3x4x4xf32> to vector<4xf32>
    %44 = vector.shape_cast %43 : vector<4xf32> to vector<1x1x4xf32>
    %c0_47 = arith.constant 0 : index
    %c2_48 = arith.constant 2 : index
    %c9_49 = arith.constant 9 : index
    %c0_50 = arith.constant 0 : index
    %45 = vector.load %arg2[%c0_47, %c2_48, %c9_49, %c0_50] : memref<1x16x16x4xf32, #tpu.memory_space<vmem>>, vector<1x3x3x4xf32>
    %46 = vector.shape_cast %45 : vector<1x3x3x4xf32> to vector<3x3x4xf32>
    %cst_51 = arith.constant dense<0xFF800000> : vector<4xf32>
    %47 = vector.multi_reduction <maximumf>, %46, %cst_51 [0, 1] : vector<3x3x4xf32> to vector<4xf32>
    %48 = vector.shape_cast %47 : vector<4xf32> to vector<1x1x4xf32>
    %c0_52 = arith.constant 0 : index
    %c2_53 = arith.constant 2 : index
    %c11_54 = arith.constant 11 : index
    %c0_55 = arith.constant 0 : index
    %49 = vector.load %arg2[%c0_52, %c2_53, %c11_54, %c0_55] : memref<1x16x16x4xf32, #tpu.memory_space<vmem>>, vector<1x3x3x4xf32>
    %50 = vector.shape_cast %49 : vector<1x3x3x4xf32> to vector<3x3x4xf32>
    %cst_56 = arith.constant dense<0xFF800000> : vector<4xf32>
    %51 = vector.multi_reduction <maximumf>, %50, %cst_56 [0, 1] : vector<3x3x4xf32> to vector<4xf32>
    %52 = vector.shape_cast %51 : vector<4xf32> to vector<1x1x4xf32>
    %c0_57 = arith.constant 0 : index
    %c2_58 = arith.constant 2 : index
    %c13_59 = arith.constant 13 : index
    %c0_60 = arith.constant 0 : index
    %53 = vector.load %arg2[%c0_57, %c2_58, %c13_59, %c0_60] : memref<1x16x16x4xf32, #tpu.memory_space<vmem>>, vector<1x3x3x4xf32>
    %54 = vector.shape_cast %53 : vector<1x3x3x4xf32> to vector<3x3x4xf32>
    %cst_61 = arith.constant dense<0xFF800000> : vector<4xf32>
    %55 = vector.multi_reduction <maximumf>, %54, %cst_61 [0, 1] : vector<3x3x4xf32> to vector<4xf32>
    %56 = vector.shape_cast %55 : vector<4xf32> to vector<1x1x4xf32>
    %57 = tpu.concatenate %32, %36, %40, %44, %48, %52, %56 in 1 : vector<1x1x4xf32>, vector<1x1x4xf32>, vector<1x1x4xf32>, vector<1x1x4xf32>, vector<1x1x4xf32>, vector<1x1x4xf32>, vector<1x1x4xf32> -> vector<1x7x4xf32>
    %c0_62 = arith.constant 0 : index
    %c4_63 = arith.constant 4 : index
    %c0_64 = arith.constant 0 : index
    %c0_65 = arith.constant 0 : index
    %58 = vector.load %arg2[%c0_62, %c4_63, %c0_64, %c0_65] : memref<1x16x16x4xf32, #tpu.memory_space<vmem>>, vector<1x3x3x4xf32>
    %59 = vector.shape_cast %58 : vector<1x3x3x4xf32> to vector<3x3x4xf32>
    %cst_66 = arith.constant dense<0xFF800000> : vector<4xf32>
    %60 = vector.multi_reduction <maximumf>, %59, %cst_66 [0, 1] : vector<3x3x4xf32> to vector<4xf32>
    %61 = vector.shape_cast %60 : vector<4xf32> to vector<1x1x4xf32>
    %c0_67 = arith.constant 0 : index
    %c4_68 = arith.constant 4 : index
    %c2_69 = arith.constant 2 : index
    %c0_70 = arith.constant 0 : index
    %62 = vector.load %arg2[%c0_67, %c4_68, %c2_69, %c0_70] : memref<1x16x16x4xf32, #tpu.memory_space<vmem>>, vector<1x3x3x4xf32>
    %63 = vector.shape_cast %62 : vector<1x3x3x4xf32> to vector<3x3x4xf32>
    %cst_71 = arith.constant dense<0xFF800000> : vector<4xf32>
    %64 = vector.multi_reduction <maximumf>, %63, %cst_71 [0, 1] : vector<3x3x4xf32> to vector<4xf32>
    %65 = vector.shape_cast %64 : vector<4xf32> to vector<1x1x4xf32>
    %c0_72 = arith.constant 0 : index
    %c4_73 = arith.constant 4 : index
    %c4_74 = arith.constant 4 : index
    %c0_75 = arith.constant 0 : index
    %66 = vector.load %arg2[%c0_72, %c4_73, %c4_74, %c0_75] : memref<1x16x16x4xf32, #tpu.memory_space<vmem>>, vector<1x3x3x4xf32>
    %67 = vector.shape_cast %66 : vector<1x3x3x4xf32> to vector<3x3x4xf32>
    %cst_76 = arith.constant dense<0xFF800000> : vector<4xf32>
    %68 = vector.multi_reduction <maximumf>, %67, %cst_76 [0, 1] : vector<3x3x4xf32> to vector<4xf32>
    %69 = vector.shape_cast %68 : vector<4xf32> to vector<1x1x4xf32>
    %c0_77 = arith.constant 0 : index
    %c4_78 = arith.constant 4 : index
    %c6_79 = arith.constant 6 : index
    %c0_80 = arith.constant 0 : index
    %70 = vector.load %arg2[%c0_77, %c4_78, %c6_79, %c0_80] : memref<1x16x16x4xf32, #tpu.memory_space<vmem>>, vector<1x3x4x4xf32>
    %71 = vector.shape_cast %70 : vector<1x3x4x4xf32> to vector<3x4x4xf32>
    %cst_81 = arith.constant dense<0xFF800000> : vector<4xf32>
    %72 = vector.multi_reduction <maximumf>, %71, %cst_81 [0, 1] : vector<3x4x4xf32> to vector<4xf32>
    %73 = vector.shape_cast %72 : vector<4xf32> to vector<1x1x4xf32>
    %c0_82 = arith.constant 0 : index
    %c4_83 = arith.constant 4 : index
    %c9_84 = arith.constant 9 : index
    %c0_85 = arith.constant 0 : index
    %74 = vector.load %arg2[%c0_82, %c4_83, %c9_84, %c0_85] : memref<1x16x16x4xf32, #tpu.memory_space<vmem>>, vector<1x3x3x4xf32>
    %75 = vector.shape_cast %74 : vector<1x3x3x4xf32> to vector<3x3x4xf32>
    %cst_86 = arith.constant dense<0xFF800000> : vector<4xf32>
    %76 = vector.multi_reduction <maximumf>, %75, %cst_86 [0, 1] : vector<3x3x4xf32> to vector<4xf32>
    %77 = vector.shape_cast %76 : vector<4xf32> to vector<1x1x4xf32>
    %c0_87 = arith.constant 0 : index
    %c4_88 = arith.constant 4 : index
    %c11_89 = arith.constant 11 : index
    %c0_90 = arith.constant 0 : index
    %78 = vector.load %arg2[%c0_87, %c4_88, %c11_89, %c0_90] : memref<1x16x16x4xf32, #tpu.memory_space<vmem>>, vector<1x3x3x4xf32>
    %79 = vector.shape_cast %78 : vector<1x3x3x4xf32> to vector<3x3x4xf32>
    %cst_91 = arith.constant dense<0xFF800000> : vector<4xf32>
    %80 = vector.multi_reduction <maximumf>, %79, %cst_91 [0, 1] : vector<3x3x4xf32> to vector<4xf32>
    %81 = vector.shape_cast %80 : vector<4xf32> to vector<1x1x4xf32>
    %c0_92 = arith.constant 0 : index
    %c4_93 = arith.constant 4 : index
    %c13_94 = arith.constant 13 : index
    %c0_95 = arith.constant 0 : index
    %82 = vector.load %arg2[%c0_92, %c4_93, %c13_94, %c0_95] : memref<1x16x16x4xf32, #tpu.memory_space<vmem>>, vector<1x3x3x4xf32>
    %83 = vector.shape_cast %82 : vector<1x3x3x4xf32> to vector<3x3x4xf32>
    %cst_96 = arith.constant dense<0xFF800000> : vector<4xf32>
    %84 = vector.multi_reduction <maximumf>, %83, %cst_96 [0, 1] : vector<3x3x4xf32> to vector<4xf32>
    %85 = vector.shape_cast %84 : vector<4xf32> to vector<1x1x4xf32>
    %86 = tpu.concatenate %61, %65, %69, %73, %77, %81, %85 in 1 : vector<1x1x4xf32>, vector<1x1x4xf32>, vector<1x1x4xf32>, vector<1x1x4xf32>, vector<1x1x4xf32>, vector<1x1x4xf32>, vector<1x1x4xf32> -> vector<1x7x4xf32>
    %c0_97 = arith.constant 0 : index
    %c6_98 = arith.constant 6 : index
    %c0_99 = arith.constant 0 : index
    %c0_100 = arith.constant 0 : index
    %87 = vector.load %arg2[%c0_97, %c6_98, %c0_99, %c0_100] : memref<1x16x16x4xf32, #tpu.memory_space<vmem>>, vector<1x4x3x4xf32>
    %88 = vector.shape_cast %87 : vector<1x4x3x4xf32> to vector<4x3x4xf32>
    %cst_101 = arith.constant dense<0xFF800000> : vector<4xf32>
    %89 = vector.multi_reduction <maximumf>, %88, %cst_101 [0, 1] : vector<4x3x4xf32> to vector<4xf32>
    %90 = vector.shape_cast %89 : vector<4xf32> to vector<1x1x4xf32>
    %c0_102 = arith.constant 0 : index
    %c6_103 = arith.constant 6 : index
    %c2_104 = arith.constant 2 : index
    %c0_105 = arith.constant 0 : index
    %91 = vector.load %arg2[%c0_102, %c6_103, %c2_104, %c0_105] : memref<1x16x16x4xf32, #tpu.memory_space<vmem>>, vector<1x4x3x4xf32>
    %92 = vector.shape_cast %91 : vector<1x4x3x4xf32> to vector<4x3x4xf32>
    %cst_106 = arith.constant dense<0xFF800000> : vector<4xf32>
    %93 = vector.multi_reduction <maximumf>, %92, %cst_106 [0, 1] : vector<4x3x4xf32> to vector<4xf32>
    %94 = vector.shape_cast %93 : vector<4xf32> to vector<1x1x4xf32>
    %c0_107 = arith.constant 0 : index
    %c6_108 = arith.constant 6 : index
    %c4_109 = arith.constant 4 : index
    %c0_110 = arith.constant 0 : index
    %95 = vector.load %arg2[%c0_107, %c6_108, %c4_109, %c0_110] : memref<1x16x16x4xf32, #tpu.memory_space<vmem>>, vector<1x4x3x4xf32>
    %96 = vector.shape_cast %95 : vector<1x4x3x4xf32> to vector<4x3x4xf32>
    %cst_111 = arith.constant dense<0xFF800000> : vector<4xf32>
    %97 = vector.multi_reduction <maximumf>, %96, %cst_111 [0, 1] : vector<4x3x4xf32> to vector<4xf32>
    %98 = vector.shape_cast %97 : vector<4xf32> to vector<1x1x4xf32>
    %c0_112 = arith.constant 0 : index
    %c6_113 = arith.constant 6 : index
    %c6_114 = arith.constant 6 : index
    %c0_115 = arith.constant 0 : index
    %99 = vector.load %arg2[%c0_112, %c6_113, %c6_114, %c0_115] : memref<1x16x16x4xf32, #tpu.memory_space<vmem>>, vector<1x4x4x4xf32>
    %100 = vector.shape_cast %99 : vector<1x4x4x4xf32> to vector<4x4x4xf32>
    %cst_116 = arith.constant dense<0xFF800000> : vector<4xf32>
    %101 = vector.multi_reduction <maximumf>, %100, %cst_116 [0, 1] : vector<4x4x4xf32> to vector<4xf32>
    %102 = vector.shape_cast %101 : vector<4xf32> to vector<1x1x4xf32>
    %c0_117 = arith.constant 0 : index
    %c6_118 = arith.constant 6 : index
    %c9_119 = arith.constant 9 : index
    %c0_120 = arith.constant 0 : index
    %103 = vector.load %arg2[%c0_117, %c6_118, %c9_119, %c0_120] : memref<1x16x16x4xf32, #tpu.memory_space<vmem>>, vector<1x4x3x4xf32>
    %104 = vector.shape_cast %103 : vector<1x4x3x4xf32> to vector<4x3x4xf32>
    %cst_121 = arith.constant dense<0xFF800000> : vector<4xf32>
    %105 = vector.multi_reduction <maximumf>, %104, %cst_121 [0, 1] : vector<4x3x4xf32> to vector<4xf32>
    %106 = vector.shape_cast %105 : vector<4xf32> to vector<1x1x4xf32>
    %c0_122 = arith.constant 0 : index
    %c6_123 = arith.constant 6 : index
    %c11_124 = arith.constant 11 : index
    %c0_125 = arith.constant 0 : index
    %107 = vector.load %arg2[%c0_122, %c6_123, %c11_124, %c0_125] : memref<1x16x16x4xf32, #tpu.memory_space<vmem>>, vector<1x4x3x4xf32>
    %108 = vector.shape_cast %107 : vector<1x4x3x4xf32> to vector<4x3x4xf32>
    %cst_126 = arith.constant dense<0xFF800000> : vector<4xf32>
    %109 = vector.multi_reduction <maximumf>, %108, %cst_126 [0, 1] : vector<4x3x4xf32> to vector<4xf32>
    %110 = vector.shape_cast %109 : vector<4xf32> to vector<1x1x4xf32>
    %c0_127 = arith.constant 0 : index
    %c6_128 = arith.constant 6 : index
    %c13_129 = arith.constant 13 : index
    %c0_130 = arith.constant 0 : index
    %111 = vector.load %arg2[%c0_127, %c6_128, %c13_129, %c0_130] : memref<1x16x16x4xf32, #tpu.memory_space<vmem>>, vector<1x4x3x4xf32>
    %112 = vector.shape_cast %111 : vector<1x4x3x4xf32> to vector<4x3x4xf32>
    %cst_131 = arith.constant dense<0xFF800000> : vector<4xf32>
    %113 = vector.multi_reduction <maximumf>, %112, %cst_131 [0, 1] : vector<4x3x4xf32> to vector<4xf32>
    %114 = vector.shape_cast %113 : vector<4xf32> to vector<1x1x4xf32>
    %115 = tpu.concatenate %90, %94, %98, %102, %106, %110, %114 in 1 : vector<1x1x4xf32>, vector<1x1x4xf32>, vector<1x1x4xf32>, vector<1x1x4xf32>, vector<1x1x4xf32>, vector<1x1x4xf32>, vector<1x1x4xf32> -> vector<1x7x4xf32>
    %c0_132 = arith.constant 0 : index
    %c9_133 = arith.constant 9 : index
    %c0_134 = arith.constant 0 : index
    %c0_135 = arith.constant 0 : index
    %116 = vector.load %arg2[%c0_132, %c9_133, %c0_134, %c0_135] : memref<1x16x16x4xf32, #tpu.memory_space<vmem>>, vector<1x3x3x4xf32>
    %117 = vector.shape_cast %116 : vector<1x3x3x4xf32> to vector<3x3x4xf32>
    %cst_136 = arith.constant dense<0xFF800000> : vector<4xf32>
    %118 = vector.multi_reduction <maximumf>, %117, %cst_136 [0, 1] : vector<3x3x4xf32> to vector<4xf32>
    %119 = vector.shape_cast %118 : vector<4xf32> to vector<1x1x4xf32>
    %c0_137 = arith.constant 0 : index
    %c9_138 = arith.constant 9 : index
    %c2_139 = arith.constant 2 : index
    %c0_140 = arith.constant 0 : index
    %120 = vector.load %arg2[%c0_137, %c9_138, %c2_139, %c0_140] : memref<1x16x16x4xf32, #tpu.memory_space<vmem>>, vector<1x3x3x4xf32>
    %121 = vector.shape_cast %120 : vector<1x3x3x4xf32> to vector<3x3x4xf32>
    %cst_141 = arith.constant dense<0xFF800000> : vector<4xf32>
    %122 = vector.multi_reduction <maximumf>, %121, %cst_141 [0, 1] : vector<3x3x4xf32> to vector<4xf32>
    %123 = vector.shape_cast %122 : vector<4xf32> to vector<1x1x4xf32>
    %c0_142 = arith.constant 0 : index
    %c9_143 = arith.constant 9 : index
    %c4_144 = arith.constant 4 : index
    %c0_145 = arith.constant 0 : index
    %124 = vector.load %arg2[%c0_142, %c9_143, %c4_144, %c0_145] : memref<1x16x16x4xf32, #tpu.memory_space<vmem>>, vector<1x3x3x4xf32>
    %125 = vector.shape_cast %124 : vector<1x3x3x4xf32> to vector<3x3x4xf32>
    %cst_146 = arith.constant dense<0xFF800000> : vector<4xf32>
    %126 = vector.multi_reduction <maximumf>, %125, %cst_146 [0, 1] : vector<3x3x4xf32> to vector<4xf32>
    %127 = vector.shape_cast %126 : vector<4xf32> to vector<1x1x4xf32>
    %c0_147 = arith.constant 0 : index
    %c9_148 = arith.constant 9 : index
    %c6_149 = arith.constant 6 : index
    %c0_150 = arith.constant 0 : index
    %128 = vector.load %arg2[%c0_147, %c9_148, %c6_149, %c0_150] : memref<1x16x16x4xf32, #tpu.memory_space<vmem>>, vector<1x3x4x4xf32>
    %129 = vector.shape_cast %128 : vector<1x3x4x4xf32> to vector<3x4x4xf32>
    %cst_151 = arith.constant dense<0xFF800000> : vector<4xf32>
    %130 = vector.multi_reduction <maximumf>, %129, %cst_151 [0, 1] : vector<3x4x4xf32> to vector<4xf32>
    %131 = vector.shape_cast %130 : vector<4xf32> to vector<1x1x4xf32>
    %c0_152 = arith.constant 0 : index
    %c9_153 = arith.constant 9 : index
    %c9_154 = arith.constant 9 : index
    %c0_155 = arith.constant 0 : index
    %132 = vector.load %arg2[%c0_152, %c9_153, %c9_154, %c0_155] : memref<1x16x16x4xf32, #tpu.memory_space<vmem>>, vector<1x3x3x4xf32>
    %133 = vector.shape_cast %132 : vector<1x3x3x4xf32> to vector<3x3x4xf32>
    %cst_156 = arith.constant dense<0xFF800000> : vector<4xf32>
    %134 = vector.multi_reduction <maximumf>, %133, %cst_156 [0, 1] : vector<3x3x4xf32> to vector<4xf32>
    %135 = vector.shape_cast %134 : vector<4xf32> to vector<1x1x4xf32>
    %c0_157 = arith.constant 0 : index
    %c9_158 = arith.constant 9 : index
    %c11_159 = arith.constant 11 : index
    %c0_160 = arith.constant 0 : index
    %136 = vector.load %arg2[%c0_157, %c9_158, %c11_159, %c0_160] : memref<1x16x16x4xf32, #tpu.memory_space<vmem>>, vector<1x3x3x4xf32>
    %137 = vector.shape_cast %136 : vector<1x3x3x4xf32> to vector<3x3x4xf32>
    %cst_161 = arith.constant dense<0xFF800000> : vector<4xf32>
    %138 = vector.multi_reduction <maximumf>, %137, %cst_161 [0, 1] : vector<3x3x4xf32> to vector<4xf32>
    %139 = vector.shape_cast %138 : vector<4xf32> to vector<1x1x4xf32>
    %c0_162 = arith.constant 0 : index
    %c9_163 = arith.constant 9 : index
    %c13_164 = arith.constant 13 : index
    %c0_165 = arith.constant 0 : index
    %140 = vector.load %arg2[%c0_162, %c9_163, %c13_164, %c0_165] : memref<1x16x16x4xf32, #tpu.memory_space<vmem>>, vector<1x3x3x4xf32>
    %141 = vector.shape_cast %140 : vector<1x3x3x4xf32> to vector<3x3x4xf32>
    %cst_166 = arith.constant dense<0xFF800000> : vector<4xf32>
    %142 = vector.multi_reduction <maximumf>, %141, %cst_166 [0, 1] : vector<3x3x4xf32> to vector<4xf32>
    %143 = vector.shape_cast %142 : vector<4xf32> to vector<1x1x4xf32>
    %144 = tpu.concatenate %119, %123, %127, %131, %135, %139, %143 in 1 : vector<1x1x4xf32>, vector<1x1x4xf32>, vector<1x1x4xf32>, vector<1x1x4xf32>, vector<1x1x4xf32>, vector<1x1x4xf32>, vector<1x1x4xf32> -> vector<1x7x4xf32>
    %c0_167 = arith.constant 0 : index
    %c11_168 = arith.constant 11 : index
    %c0_169 = arith.constant 0 : index
    %c0_170 = arith.constant 0 : index
    %145 = vector.load %arg2[%c0_167, %c11_168, %c0_169, %c0_170] : memref<1x16x16x4xf32, #tpu.memory_space<vmem>>, vector<1x3x3x4xf32>
    %146 = vector.shape_cast %145 : vector<1x3x3x4xf32> to vector<3x3x4xf32>
    %cst_171 = arith.constant dense<0xFF800000> : vector<4xf32>
    %147 = vector.multi_reduction <maximumf>, %146, %cst_171 [0, 1] : vector<3x3x4xf32> to vector<4xf32>
    %148 = vector.shape_cast %147 : vector<4xf32> to vector<1x1x4xf32>
    %c0_172 = arith.constant 0 : index
    %c11_173 = arith.constant 11 : index
    %c2_174 = arith.constant 2 : index
    %c0_175 = arith.constant 0 : index
    %149 = vector.load %arg2[%c0_172, %c11_173, %c2_174, %c0_175] : memref<1x16x16x4xf32, #tpu.memory_space<vmem>>, vector<1x3x3x4xf32>
    %150 = vector.shape_cast %149 : vector<1x3x3x4xf32> to vector<3x3x4xf32>
    %cst_176 = arith.constant dense<0xFF800000> : vector<4xf32>
    %151 = vector.multi_reduction <maximumf>, %150, %cst_176 [0, 1] : vector<3x3x4xf32> to vector<4xf32>
    %152 = vector.shape_cast %151 : vector<4xf32> to vector<1x1x4xf32>
    %c0_177 = arith.constant 0 : index
    %c11_178 = arith.constant 11 : index
    %c4_179 = arith.constant 4 : index
    %c0_180 = arith.constant 0 : index
    %153 = vector.load %arg2[%c0_177, %c11_178, %c4_179, %c0_180] : memref<1x16x16x4xf32, #tpu.memory_space<vmem>>, vector<1x3x3x4xf32>
    %154 = vector.shape_cast %153 : vector<1x3x3x4xf32> to vector<3x3x4xf32>
    %cst_181 = arith.constant dense<0xFF800000> : vector<4xf32>
    %155 = vector.multi_reduction <maximumf>, %154, %cst_181 [0, 1] : vector<3x3x4xf32> to vector<4xf32>
    %156 = vector.shape_cast %155 : vector<4xf32> to vector<1x1x4xf32>
    %c0_182 = arith.constant 0 : index
    %c11_183 = arith.constant 11 : index
    %c6_184 = arith.constant 6 : index
    %c0_185 = arith.constant 0 : index
    %157 = vector.load %arg2[%c0_182, %c11_183, %c6_184, %c0_185] : memref<1x16x16x4xf32, #tpu.memory_space<vmem>>, vector<1x3x4x4xf32>
    %158 = vector.shape_cast %157 : vector<1x3x4x4xf32> to vector<3x4x4xf32>
    %cst_186 = arith.constant dense<0xFF800000> : vector<4xf32>
    %159 = vector.multi_reduction <maximumf>, %158, %cst_186 [0, 1] : vector<3x4x4xf32> to vector<4xf32>
    %160 = vector.shape_cast %159 : vector<4xf32> to vector<1x1x4xf32>
    %c0_187 = arith.constant 0 : index
    %c11_188 = arith.constant 11 : index
    %c9_189 = arith.constant 9 : index
    %c0_190 = arith.constant 0 : index
    %161 = vector.load %arg2[%c0_187, %c11_188, %c9_189, %c0_190] : memref<1x16x16x4xf32, #tpu.memory_space<vmem>>, vector<1x3x3x4xf32>
    %162 = vector.shape_cast %161 : vector<1x3x3x4xf32> to vector<3x3x4xf32>
    %cst_191 = arith.constant dense<0xFF800000> : vector<4xf32>
    %163 = vector.multi_reduction <maximumf>, %162, %cst_191 [0, 1] : vector<3x3x4xf32> to vector<4xf32>
    %164 = vector.shape_cast %163 : vector<4xf32> to vector<1x1x4xf32>
    %c0_192 = arith.constant 0 : index
    %c11_193 = arith.constant 11 : index
    %c11_194 = arith.constant 11 : index
    %c0_195 = arith.constant 0 : index
    %165 = vector.load %arg2[%c0_192, %c11_193, %c11_194, %c0_195] : memref<1x16x16x4xf32, #tpu.memory_space<vmem>>, vector<1x3x3x4xf32>
    %166 = vector.shape_cast %165 : vector<1x3x3x4xf32> to vector<3x3x4xf32>
    %cst_196 = arith.constant dense<0xFF800000> : vector<4xf32>
    %167 = vector.multi_reduction <maximumf>, %166, %cst_196 [0, 1] : vector<3x3x4xf32> to vector<4xf32>
    %168 = vector.shape_cast %167 : vector<4xf32> to vector<1x1x4xf32>
    %c0_197 = arith.constant 0 : index
    %c11_198 = arith.constant 11 : index
    %c13_199 = arith.constant 13 : index
    %c0_200 = arith.constant 0 : index
    %169 = vector.load %arg2[%c0_197, %c11_198, %c13_199, %c0_200] : memref<1x16x16x4xf32, #tpu.memory_space<vmem>>, vector<1x3x3x4xf32>
    %170 = vector.shape_cast %169 : vector<1x3x3x4xf32> to vector<3x3x4xf32>
    %cst_201 = arith.constant dense<0xFF800000> : vector<4xf32>
    %171 = vector.multi_reduction <maximumf>, %170, %cst_201 [0, 1] : vector<3x3x4xf32> to vector<4xf32>
    %172 = vector.shape_cast %171 : vector<4xf32> to vector<1x1x4xf32>
    %173 = tpu.concatenate %148, %152, %156, %160, %164, %168, %172 in 1 : vector<1x1x4xf32>, vector<1x1x4xf32>, vector<1x1x4xf32>, vector<1x1x4xf32>, vector<1x1x4xf32>, vector<1x1x4xf32>, vector<1x1x4xf32> -> vector<1x7x4xf32>
    %c0_202 = arith.constant 0 : index
    %c13_203 = arith.constant 13 : index
    %c0_204 = arith.constant 0 : index
    %c0_205 = arith.constant 0 : index
    %174 = vector.load %arg2[%c0_202, %c13_203, %c0_204, %c0_205] : memref<1x16x16x4xf32, #tpu.memory_space<vmem>>, vector<1x3x3x4xf32>
    %175 = vector.shape_cast %174 : vector<1x3x3x4xf32> to vector<3x3x4xf32>
    %cst_206 = arith.constant dense<0xFF800000> : vector<4xf32>
    %176 = vector.multi_reduction <maximumf>, %175, %cst_206 [0, 1] : vector<3x3x4xf32> to vector<4xf32>
    %177 = vector.shape_cast %176 : vector<4xf32> to vector<1x1x4xf32>
    %c0_207 = arith.constant 0 : index
    %c13_208 = arith.constant 13 : index
    %c2_209 = arith.constant 2 : index
    %c0_210 = arith.constant 0 : index
    %178 = vector.load %arg2[%c0_207, %c13_208, %c2_209, %c0_210] : memref<1x16x16x4xf32, #tpu.memory_space<vmem>>, vector<1x3x3x4xf32>
    %179 = vector.shape_cast %178 : vector<1x3x3x4xf32> to vector<3x3x4xf32>
    %cst_211 = arith.constant dense<0xFF800000> : vector<4xf32>
    %180 = vector.multi_reduction <maximumf>, %179, %cst_211 [0, 1] : vector<3x3x4xf32> to vector<4xf32>
    %181 = vector.shape_cast %180 : vector<4xf32> to vector<1x1x4xf32>
    %c0_212 = arith.constant 0 : index
    %c13_213 = arith.constant 13 : index
    %c4_214 = arith.constant 4 : index
    %c0_215 = arith.constant 0 : index
    %182 = vector.load %arg2[%c0_212, %c13_213, %c4_214, %c0_215] : memref<1x16x16x4xf32, #tpu.memory_space<vmem>>, vector<1x3x3x4xf32>
    %183 = vector.shape_cast %182 : vector<1x3x3x4xf32> to vector<3x3x4xf32>
    %cst_216 = arith.constant dense<0xFF800000> : vector<4xf32>
    %184 = vector.multi_reduction <maximumf>, %183, %cst_216 [0, 1] : vector<3x3x4xf32> to vector<4xf32>
    %185 = vector.shape_cast %184 : vector<4xf32> to vector<1x1x4xf32>
    %c0_217 = arith.constant 0 : index
    %c13_218 = arith.constant 13 : index
    %c6_219 = arith.constant 6 : index
    %c0_220 = arith.constant 0 : index
    %186 = vector.load %arg2[%c0_217, %c13_218, %c6_219, %c0_220] : memref<1x16x16x4xf32, #tpu.memory_space<vmem>>, vector<1x3x4x4xf32>
    %187 = vector.shape_cast %186 : vector<1x3x4x4xf32> to vector<3x4x4xf32>
    %cst_221 = arith.constant dense<0xFF800000> : vector<4xf32>
    %188 = vector.multi_reduction <maximumf>, %187, %cst_221 [0, 1] : vector<3x4x4xf32> to vector<4xf32>
    %189 = vector.shape_cast %188 : vector<4xf32> to vector<1x1x4xf32>
    %c0_222 = arith.constant 0 : index
    %c13_223 = arith.constant 13 : index
    %c9_224 = arith.constant 9 : index
    %c0_225 = arith.constant 0 : index
    %190 = vector.load %arg2[%c0_222, %c13_223, %c9_224, %c0_225] : memref<1x16x16x4xf32, #tpu.memory_space<vmem>>, vector<1x3x3x4xf32>
    %191 = vector.shape_cast %190 : vector<1x3x3x4xf32> to vector<3x3x4xf32>
    %cst_226 = arith.constant dense<0xFF800000> : vector<4xf32>
    %192 = vector.multi_reduction <maximumf>, %191, %cst_226 [0, 1] : vector<3x3x4xf32> to vector<4xf32>
    %193 = vector.shape_cast %192 : vector<4xf32> to vector<1x1x4xf32>
    %c0_227 = arith.constant 0 : index
    %c13_228 = arith.constant 13 : index
    %c11_229 = arith.constant 11 : index
    %c0_230 = arith.constant 0 : index
    %194 = vector.load %arg2[%c0_227, %c13_228, %c11_229, %c0_230] : memref<1x16x16x4xf32, #tpu.memory_space<vmem>>, vector<1x3x3x4xf32>
    %195 = vector.shape_cast %194 : vector<1x3x3x4xf32> to vector<3x3x4xf32>
    %cst_231 = arith.constant dense<0xFF800000> : vector<4xf32>
    %196 = vector.multi_reduction <maximumf>, %195, %cst_231 [0, 1] : vector<3x3x4xf32> to vector<4xf32>
    %197 = vector.shape_cast %196 : vector<4xf32> to vector<1x1x4xf32>
    %c0_232 = arith.constant 0 : index
    %c13_233 = arith.constant 13 : index
    %c13_234 = arith.constant 13 : index
    %c0_235 = arith.constant 0 : index
    %198 = vector.load %arg2[%c0_232, %c13_233, %c13_234, %c0_235] : memref<1x16x16x4xf32, #tpu.memory_space<vmem>>, vector<1x3x3x4xf32>
    %199 = vector.shape_cast %198 : vector<1x3x3x4xf32> to vector<3x3x4xf32>
    %cst_236 = arith.constant dense<0xFF800000> : vector<4xf32>
    %200 = vector.multi_reduction <maximumf>, %199, %cst_236 [0, 1] : vector<3x3x4xf32> to vector<4xf32>
    %201 = vector.shape_cast %200 : vector<4xf32> to vector<1x1x4xf32>
    %202 = tpu.concatenate %177, %181, %185, %189, %193, %197, %201 in 1 : vector<1x1x4xf32>, vector<1x1x4xf32>, vector<1x1x4xf32>, vector<1x1x4xf32>, vector<1x1x4xf32>, vector<1x1x4xf32>, vector<1x1x4xf32> -> vector<1x7x4xf32>
    %203 = tpu.concatenate %28, %57, %86, %115, %144, %173, %202 in 0 : vector<1x7x4xf32>, vector<1x7x4xf32>, vector<1x7x4xf32>, vector<1x7x4xf32>, vector<1x7x4xf32>, vector<1x7x4xf32>, vector<1x7x4xf32> -> vector<7x7x4xf32>
    %c0_237 = arith.constant 0 : index
    %c0_238 = arith.constant 0 : index
    %c0_239 = arith.constant 0 : index
    %c0_240 = arith.constant 0 : index
    %204 = vector.load %arg3[%c0_237, %c0_238, %c0_239, %c0_240] : memref<1x7x7x4xf32, #tpu.memory_space<vmem>>, vector<1x7x7x4xf32>
    %205 = vector.shape_cast %204 : vector<1x7x7x4xf32> to vector<7x7x4xf32>
    %206 = vector.shape_cast %203 : vector<7x7x4xf32> to vector<1x7x7x4xf32>
    tpu.vector_store %arg3[%c0_237, %c0_238, %c0_239, %c0_240], %206 {strides = array<i32>} : memref<1x7x7x4xf32, #tpu.memory_space<vmem>>, vector<1x7x7x4xf32>,
    return
  }
  func.func @transform_0(%arg0: i32, %arg1: i32) -> (i32, i32, i32, i32) {
    %c0_i32 = arith.constant 0 : i32
    %c0_i32_0 = arith.constant 0 : i32
    %c0_i32_1 = arith.constant 0 : i32
    return %arg0, %c0_i32, %c0_i32_0, %arg1 : i32, i32, i32, i32
  }
  func.func @transform_1(%arg0: i32, %arg1: i32) -> (i32, i32, i32, i32) {
    %c0_i32 = arith.constant 0 : i32
    %c0_i32_0 = arith.constant 0 : i32
    %c0_i32_1 = arith.constant 0 : i32
    return %arg0, %c0_i32, %c0_i32_0, %arg1 : i32, i32, i32, i32
  }
}

</mosaic_0001>

<llo_original>
// kernel: tpu_custom_call.1
$region0: #{tpu_custom_call.1}
  #allocation0 [shape = 'u32[]', space=smem, size = 0x4, offset = 0x4, fixed_abs, tag = 'smem constant byte address 0x4 - core index']
  #allocation1 [shape = 'u32[72,128]{1,0:T(1,128)}', space=vmem, size = 0x9000, scoped, tag = 'internal scratch']
  %s0 = inlined_call_operand.vmem [shape: f32[2,16,16,4], index: 0, kind: input, shape index: {}]
  %s1 = inlined_call_operand.vmem [shape: f32[2,7,7,4], index: 1, kind: output, shape index: {}]
  %s2 = sld [smem:[#allocation0]]
  $region37: #{tpu_custom_call.1} parent=0
    _
  %s4 = ssub.s32 1, %s2
  %s5 = scalar_select 0, %s4, %s2
  loop: start=0, step=1, limit=4
  $region2: #{tpu_custom_call.1} parent=0 // loop_pre_header
    _
  $region3: #{tpu_custom_call.1} parent=0 // loop_header
    %s7 = sphi 0, %s11
    %p8 = scmp.ge.s32.totalorder %s7, 4
    %s14 = sphi 0, %s26
    %s15 = sphi 0, %s22
    %s16 = sphi 0, %s14
    %s17 = sphi 0, %s15
    %s18 = sphi 0, %s16
    %s19 = sphi 0, %s17
    %s31 = sphi 0, %s33
    %s34 = sphi 0, %s31
    %s35 = sphi 0, %s34
    %s51 = sphi 0, %s35
    %s59 = sphi 0, %s61
    %s62 = sphi 0, %s59
    %s63 = sphi 0, %s62
    %s79 = sphi 0, %s63
  $region4: #{tpu_custom_call.1} parent=0 // loop_header_branch
    %10 = sbr.rel (%p8) target = $region8
  $region5: #{tpu_custom_call.1} parent=0 // loop_body
    %s12 = ssub.s32 %s7, 1
    %s13 = ssub.s32 %s7, 2
    %s20 = sadd.s32 1, %s15
    %p21 = scmp.ge.s32.totalorder %s20, 1
    %s22 = scalar_select %p21, 0, %s20
    %s23 = sadd.s32 1, %s14
    %s24 = scalar_select %p21, %s23, %s14
    %p25 = scmp.ge.s32.totalorder %s24, 2
    %s26 = scalar_select %p25, 0, %s24
    %s27 = ssub.s32 %s14, %s26
    %s28 = ssub.s32 %s15, %s22
    %s29 = sor.u32 %s27, %s28
    %p30 = scmp.eq.s32.totalorder %s29, 0
    %s32 = sadd.s32 %s31, 1
    %s33 = scalar_select %p30, %s31, %s32
    %p36 = pneg %p30
    %p37 = scmp.eq.s32.totalorder %s7, 1
    %p38 = por %p36, %p37
    %p39 = scmp.ne.s32.totalorder %s31, %s34
    %p40 = scmp.eq.s32.totalorder %s7, 0
    %p41 = por %p39, %p40
    %p42 = scmp.ne.s32.totalorder %s31, %s34
    %p43 = scmp.eq.s32.totalorder %s12, 1
    %p44 = por %p42, %p43
    %p45 = scmp.ne.s32.totalorder %s34, %s35
    %p46 = scmp.eq.s32.totalorder %s12, 0
    %p47 = por %p45, %p46
    %p48 = scmp.ne.s32.totalorder %s34, %s35
    %p49 = scmp.eq.s32.totalorder %s13, 1
    %p50 = por %p48, %p49
    %p52 = scmp.ne.s32.totalorder %s35, %s51
    %p53 = scmp.eq.s32.totalorder %s13, 0
    %p54 = por %p52, %p53
    %s55 = ssub.s32 %s14, %s26
    %s56 = ssub.s32 %s15, %s22
    %s57 = sor.u32 %s55, %s56
    %p58 = scmp.eq.s32.totalorder %s57, 0
    %s60 = sadd.s32 %s59, 1
    %s61 = scalar_select %p58, %s59, %s60
    %p64 = pneg %p58
    %p65 = scmp.eq.s32.totalorder %s7, 1
    %p66 = por %p64, %p65
    %p67 = scmp.ne.s32.totalorder %s59, %s62
    %p68 = scmp.eq.s32.totalorder %s7, 0
    %p69 = por %p67, %p68
    %p70 = scmp.ne.s32.totalorder %s59, %s62
    %p71 = scmp.eq.s32.totalorder %s12, 1
    %p72 = por %p70, %p71
    %p73 = scmp.ne.s32.totalorder %s62, %s63
    %p74 = scmp.eq.s32.totalorder %s12, 0
    %p75 = por %p73, %p74
    %p76 = scmp.ne.s32.totalorder %s62, %s63
    %p77 = scmp.eq.s32.totalorder %s13, 1
    %p78 = por %p76, %p77
    %p80 = scmp.ne.s32.totalorder %s63, %s79
    %p81 = scmp.eq.s32.totalorder %s13, 0
    %p82 = por %p80, %p81
    %p83 = scmp.le.s32.totalorder 1, %s7
    %p84 = scmp.lt.s32.totalorder %s7, 3
    %p85 = pnand %p83, %p84
    %p86 = pneg %p85
    // Predicated region
    $region9: #{tpu_custom_call.1} parent=5 // pred_check
      _
    $region10: #{tpu_custom_call.1} parent=5 // pred_check_branch
      %88 = sbr.rel (%p85) target = $region12
    $region11: #{tpu_custom_call.1} parent=5 // pred_region
      %s89 = ssub.s32 %s7, 1
    $region12: #{tpu_custom_call.1} parent=5 // pred_fallthru
      _
    %p90 = scmp.lt.s32.totalorder %s7, 2
    // Predicated region
    $region13: #{tpu_custom_call.1} parent=5 // pred_check
      %p91 = pneg %p90
    $region14: #{tpu_custom_call.1} parent=5 // pred_check_branch
      %93 = sbr.rel (%p91) target = $region16
    $region15: #{tpu_custom_call.1} parent=5 // pred_region
      // Predicated region
      $region17: #{tpu_custom_call.1} parent=15 // pred_check
        %p94 = pneg %p41
      $region18: #{tpu_custom_call.1} parent=15 // pred_check_branch
        %96 = sbr.rel (%p94) target = $region20
      $region19: #{tpu_custom_call.1} parent=15 // pred_region
        %p97 = scmp.lt.s32.totalorder %s14, 1
        %s98 = scalar_select %p97, %s14, 1
        %p99 = scmp.lt.s32.totalorder %s15, 0
        %s100 = scalar_select %p99, %s15, 0
        %s101 = smul.addr %s98, 32
        %s102 = sadd.s32 %s100, %s101
        %s103 = smul.addr %s102, 8
        %s104 = scalar_lea.vmem %s0, %s103
      $region20: #{tpu_custom_call.1} parent=15 // pred_fallthru
        _
    $region16: #{tpu_custom_call.1} parent=5 // pred_fallthru
      _
    %p105 = scmp.le.s32.totalorder 1, %s7
    %p106 = scmp.lt.s32.totalorder %s7, 3
    %p107 = pnand %p105, %p106
    %p108 = pneg %p107
    // Predicated region
    $region21: #{tpu_custom_call.1} parent=5 // pred_check
      _
    $region22: #{tpu_custom_call.1} parent=5 // pred_check_branch
      %110 = sbr.rel (%p107) target = $region24
    $region23: #{tpu_custom_call.1} parent=5 // pred_region
      %s111 = ssub.s32 %s7, 1
      %p112 = scmp.lt.s32.totalorder %s16, 1
      %s113 = scalar_select %p112, %s16, 1
      %p114 = scmp.lt.s32.totalorder %s17, 0
      %s115 = scalar_select %p114, %s17, 0
      %s116 = smul.addr %s113, 32
      %s117 = sadd.s32 %s115, %s116
      %s118 = smul.addr %s117, 8
      %s119 = scalar_lea.vmem %s0, %s118
      %p120 = pneg %p47
      %p121 = pneg %p44
      %p122 = pneg %p75
      %p123 = pneg %p72
      %p124 = scmp.lt.s32.totalorder %s16, 1
      %s125 = scalar_select %p124, %s16, 1
      %p126 = scmp.lt.s32.totalorder %s17, 0
      %s127 = scalar_select %p126, %s17, 0
      %s128 = smul.addr %s125, 7
      %s129 = sadd.s32 %s127, %s128
      %s130 = smul.addr %s129, 8
      %s131 = scalar_lea.vmem %s1, %s130
      %p132 = scmp.lt.s32.totalorder %s16, 1
      %s133 = scalar_select %p132, %s16, 1
      %p134 = scmp.lt.s32.totalorder %s17, 0
      %s135 = scalar_select %p134, %s17, 0
      %s136 = smul.addr %s133, 32
      %s137 = sadd.s32 %s135, %s136
      %s138 = smul.addr %s137, 8
      %s139 = scalar_lea.vmem %s0, %s138
      %p140 = scmp.lt.s32.totalorder %s16, 1
      %s141 = scalar_select %p140, %s16, 1
      %p142 = scmp.lt.s32.totalorder %s17, 0
      %s143 = scalar_select %p142, %s17, 0
      %s144 = smul.addr %s141, 7
      %s145 = sadd.s32 %s143, %s144
      %s146 = smul.addr %s145, 8
      %s147 = scalar_lea.vmem %s1, %s146
      %v148 = vld [vmem:[%s139] sm:$0x7]
      %v149 = vld [vmem:[%s139 + $0x10] sm:$0x7]
      %v150 = vld [vmem:[%s139 + $0x20] sm:$0x7]
      %vm151 = vcmask 26624
      %v152 = vsel %vm151, %v148, -inf
      %v153 = vsel %vm151, %v149, -inf
      %v154 = vsel %vm151, %v150, -inf
      %v155 = vmax.f32 %v152, %v153
      %v156 = vmax.f32 %v155, %v154
      %v157 = vrot.slane %v156, 4
      %v158 = vmax.f32 %v156, %v157
      %v159 = vrot.slane %v158, 2
      %v160 = vmax.f32 %v158, %v159
      %v161 = vrot.slane %v160, 1
      %v162 = vmax.f32 %v160, %v161
      %v163 = vld [vmem:[%s139 + $0x2] sm:$0x7]
      %v164 = vld [vmem:[%s139 + $0x12] sm:$0x7]
      %v165 = vld [vmem:[%s139 + $0x22] sm:$0x7]
      %v166 = vsel %vm151, %v163, -inf
      %v167 = vsel %vm151, %v164, -inf
      %v168 = vsel %vm151, %v165, -inf
      %v169 = vmax.f32 %v166, %v167
      %v170 = vmax.f32 %v169, %v168
      %v171 = vrot.slane %v170, 4
      %v172 = vmax.f32 %v170, %v171
      %v173 = vrot.slane %v172, 2
      %v174 = vmax.f32 %v172, %v173
      %v175 = vrot.slane %v174, 1
      %v176 = vmax.f32 %v174, %v175
      %v177 = vld [vmem:[%s139 + $0x4] sm:$0x7]
      %v178 = vld [vmem:[%s139 + $0x14] sm:$0x7]
      %v179 = vld [vmem:[%s139 + $0x24] sm:$0x7]
      %v180 = vsel %vm151, %v177, -inf
      %v181 = vsel %vm151, %v178, -inf
      %v182 = vsel %vm151, %v179, -inf
      %v183 = vmax.f32 %v180, %v181
      %v184 = vmax.f32 %v183, %v182
      %v185 = vrot.slane %v184, 4
      %v186 = vmax.f32 %v184, %v185
      %v187 = vrot.slane %v186, 2
      %v188 = vmax.f32 %v186, %v187
      %v189 = vrot.slane %v188, 1
      %v190 = vmax.f32 %v188, %v189
      %v191 = vld [vmem:[%s139 + $0x6] sm:$0xf]
      %v192 = vld [vmem:[%s139 + $0x16] sm:$0xf]
      %v193 = vld [vmem:[%s139 + $0x26] sm:$0xf]
      %vm194 = vcmask 27648
      %v195 = vsel %vm194, %v191, -inf
      %v196 = vsel %vm194, %v192, -inf
      %v197 = vsel %vm194, %v193, -inf
      %v198 = vmax.f32 %v195, %v196
      %v199 = vmax.f32 %v198, %v197
      %v200 = vrot.slane %v199, 4
      %v201 = vmax.f32 %v199, %v200
      %v202 = vrot.slane %v201, 2
      %v203 = vmax.f32 %v201, %v202
      %v204 = vrot.slane %v203, 1
      %v205 = vmax.f32 %v203, %v204
      %v206 = vld [vmem:[%s139 + $0x9] sm:$0x7]
      %v207 = vld [vmem:[%s139 + $0x19] sm:$0x7]
      %v208 = vld [vmem:[%s139 + $0x29] sm:$0x7]
      %v209 = vsel %vm151, %v206, -inf
      %v210 = vsel %vm151, %v207, -inf
      %v211 = vsel %vm151, %v208, -inf
      %v212 = vmax.f32 %v209, %v210
      %v213 = vmax.f32 %v212, %v211
      %v214 = vrot.slane %v213, 4
      %v215 = vmax.f32 %v213, %v214
      %v216 = vrot.slane %v215, 2
      %v217 = vmax.f32 %v215, %v216
      %v218 = vrot.slane %v217, 1
      %v219 = vmax.f32 %v217, %v218
      %v220 = vld [vmem:[%s139 + $0xb] sm:$0x7]
      %v221 = vld [vmem:[%s139 + $0x1b] sm:$0x7]
      %v222 = vld [vmem:[%s139 + $0x2b] sm:$0x7]
      %v223 = vsel %vm151, %v220, -inf
      %v224 = vsel %vm151, %v221, -inf
      %v225 = vsel %vm151, %v222, -inf
      %v226 = vmax.f32 %v223, %v224
      %v227 = vmax.f32 %v226, %v225
      %v228 = vrot.slane %v227, 4
      %v229 = vmax.f32 %v227, %v228
      %v230 = vrot.slane %v229, 2
      %v231 = vmax.f32 %v229, %v230
      %v232 = vrot.slane %v231, 1
      %v233 = vmax.f32 %v231, %v232
      %v234 = vld [vmem:[%s139 + $0xd] sm:$0x7]
      %v235 = vld [vmem:[%s139 + $0x1d] sm:$0x7]
      %v236 = vld [vmem:[%s139 + $0x2d] sm:$0x7]
      %v237 = vsel %vm151, %v234, -inf
      %v238 = vsel %vm151, %v235, -inf
      %v239 = vsel %vm151, %v236, -inf
      %v240 = vmax.f32 %v237, %v238
      %v241 = vmax.f32 %v240, %v239
      %v242 = vrot.slane %v241, 4
      %v243 = vmax.f32 %v241, %v242
      %v244 = vrot.slane %v243, 2
      %v245 = vmax.f32 %v243, %v244
      %v246 = vrot.slane %v245, 1
      %v247 = vmax.f32 %v245, %v246
      %vm248 = vcmask 1040384
      %v249 = vsel %vm248, %v162, %v176
      %vm250 = vcmask 1041408
      %v251 = vsel %vm250, %v249, %v190
      %vm252 = vcmask 1042432
      %v253 = vsel %vm252, %v251, %v205
      %vm254 = vcmask 1043456
      %v255 = vsel %vm254, %v253, %v219
      %vm256 = vcmask 1044480
      %v257 = vsel %vm256, %v255, %v233
      %vm258 = vcmask 1045504
      %v259 = vsel %vm258, %v257, %v247
      %s260 = scalar_lea.vmem %s139, 32
      %v261 = vld [vmem:[%s260] sm:$0x7]
      %v262 = vld [vmem:[%s260 + $0x10] sm:$0x7]
      %v263 = vld [vmem:[%s260 + $0x20] sm:$0x7]
      %v264 = vsel %vm151, %v261, -inf
      %v265 = vsel %vm151, %v262, -inf
      %v266 = vsel %vm151, %v263, -inf
      %v267 = vmax.f32 %v264, %v265
      %v268 = vmax.f32 %v267, %v266
      %v269 = vrot.slane %v268, 4
      %v270 = vmax.f32 %v268, %v269
      %v271 = vrot.slane %v270, 2
      %v272 = vmax.f32 %v270, %v271
      %v273 = vrot.slane %v272, 1
      %v274 = vmax.f32 %v272, %v273
      %v275 = vld [vmem:[%s260 + $0x2] sm:$0x7]
      %v276 = vld [vmem:[%s260 + $0x12] sm:$0x7]
      %v277 = vld [vmem:[%s260 + $0x22] sm:$0x7]
      %v278 = vsel %vm151, %v275, -inf
      %v279 = vsel %vm151, %v276, -inf
      %v280 = vsel %vm151, %v277, -inf
      %v281 = vmax.f32 %v278, %v279
      %v282 = vmax.f32 %v281, %v280
      %v283 = vrot.slane %v282, 4
      %v284 = vmax.f32 %v282, %v283
      %v285 = vrot.slane %v284, 2
      %v286 = vmax.f32 %v284, %v285
      %v287 = vrot.slane %v286, 1
      %v288 = vmax.f32 %v286, %v287
      %v289 = vld [vmem:[%s260 + $0x4] sm:$0x7]
      %v290 = vld [vmem:[%s260 + $0x14] sm:$0x7]
      %v291 = vld [vmem:[%s260 + $0x24] sm:$0x7]
      %v292 = vsel %vm151, %v289, -inf
      %v293 = vsel %vm151, %v290, -inf
      %v294 = vsel %vm151, %v291, -inf
      %v295 = vmax.f32 %v292, %v293
      %v296 = vmax.f32 %v295, %v294
      %v297 = vrot.slane %v296, 4
      %v298 = vmax.f32 %v296, %v297
      %v299 = vrot.slane %v298, 2
      %v300 = vmax.f32 %v298, %v299
      %v301 = vrot.slane %v300, 1
      %v302 = vmax.f32 %v300, %v301
      %v303 = vld [vmem:[%s260 + $0x6] sm:$0xf]
      %v304 = vld [vmem:[%s260 + $0x16] sm:$0xf]
      %v305 = vld [vmem:[%s260 + $0x26] sm:$0xf]
      %v306 = vsel %vm194, %v303, -inf
      %v307 = vsel %vm194, %v304, -inf
      %v308 = vsel %vm194, %v305, -inf
      %v309 = vmax.f32 %v306, %v307
      %v310 = vmax.f32 %v309, %v308
      %v311 = vrot.slane %v310, 4
      %v312 = vmax.f32 %v310, %v311
      %v313 = vrot.slane %v312, 2
      %v314 = vmax.f32 %v312, %v313
      %v315 = vrot.slane %v314, 1
      %v316 = vmax.f32 %v314, %v315
      %v317 = vld [vmem:[%s260 + $0x9] sm:$0x7]
      %v318 = vld [vmem:[%s260 + $0x19] sm:$0x7]
      %v319 = vld [vmem:[%s260 + $0x29] sm:$0x7]
      %v320 = vsel %vm151, %v317, -inf
      %v321 = vsel %vm151, %v318, -inf
      %v322 = vsel %vm151, %v319, -inf
      %v323 = vmax.f32 %v320, %v321
      %v324 = vmax.f32 %v323, %v322
      %v325 = vrot.slane %v324, 4
      %v326 = vmax.f32 %v324, %v325
      %v327 = vrot.slane %v326, 2
      %v328 = vmax.f32 %v326, %v327
      %v329 = vrot.slane %v328, 1
      %v330 = vmax.f32 %v328, %v329
      %v331 = vld [vmem:[%s260 + $0xb] sm:$0x7]
      %v332 = vld [vmem:[%s260 + $0x1b] sm:$0x7]
      %v333 = vld [vmem:[%s260 + $0x2b] sm:$0x7]
      %v334 = vsel %vm151, %v331, -inf
      %v335 = vsel %vm151, %v332, -inf
      %v336 = vsel %vm151, %v333, -inf
      %v337 = vmax.f32 %v334, %v335
      %v338 = vmax.f32 %v337, %v336
      %v339 = vrot.slane %v338, 4
      %v340 = vmax.f32 %v338, %v339
      %v341 = vrot.slane %v340, 2
      %v342 = vmax.f32 %v340, %v341
      %v343 = vrot.slane %v342, 1
      %v344 = vmax.f32 %v342, %v343
      %v345 = vld [vmem:[%s260 + $0xd] sm:$0x7]
      %v346 = vld [vmem:[%s260 + $0x1d] sm:$0x7]
      %v347 = vld [vmem:[%s260 + $0x2d] sm:$0x7]
      %v348 = vsel %vm151, %v345, -inf
      %v349 = vsel %vm151, %v346, -inf
      %v350 = vsel %vm151, %v347, -inf
      %v351 = vmax.f32 %v348, %v349
      %v352 = vmax.f32 %v351, %v350
      %v353 = vrot.slane %v352, 4
      %v354 = vmax.f32 %v352, %v353
      %v355 = vrot.slane %v354, 2
      %v356 = vmax.f32 %v354, %v355
      %v357 = vrot.slane %v356, 1
      %v358 = vmax.f32 %v356, %v357
      %v359 = vsel %vm248, %v274, %v288
      %v360 = vsel %vm250, %v359, %v302
      %v361 = vsel %vm252, %v360, %v316
      %v362 = vsel %vm254, %v361, %v330
      %v363 = vsel %vm256, %v362, %v344
      %v364 = vsel %vm258, %v363, %v358
      %s365 = scalar_lea.vmem %s139, 64
      %v366 = vld [vmem:[%s365] sm:$0x7]
      %v367 = vld [vmem:[%s365 + $0x10] sm:$0x7]
      %v368 = vld [vmem:[%s365 + $0x20] sm:$0x7]
      %v369 = vsel %vm151, %v366, -inf
      %v370 = vsel %vm151, %v367, -inf
      %v371 = vsel %vm151, %v368, -inf
      %v372 = vmax.f32 %v369, %v370
      %v373 = vmax.f32 %v372, %v371
      %v374 = vrot.slane %v373, 4
      %v375 = vmax.f32 %v373, %v374
      %v376 = vrot.slane %v375, 2
      %v377 = vmax.f32 %v375, %v376
      %v378 = vrot.slane %v377, 1
      %v379 = vmax.f32 %v377, %v378
      %v380 = vld [vmem:[%s365 + $0x2] sm:$0x7]
      %v381 = vld [vmem:[%s365 + $0x12] sm:$0x7]
      %v382 = vld [vmem:[%s365 + $0x22] sm:$0x7]
      %v383 = vsel %vm151, %v380, -inf
      %v384 = vsel %vm151, %v381, -inf
      %v385 = vsel %vm151, %v382, -inf
      %v386 = vmax.f32 %v383, %v384
      %v387 = vmax.f32 %v386, %v385
      %v388 = vrot.slane %v387, 4
      %v389 = vmax.f32 %v387, %v388
      %v390 = vrot.slane %v389, 2
      %v391 = vmax.f32 %v389, %v390
      %v392 = vrot.slane %v391, 1
      %v393 = vmax.f32 %v391, %v392
      %v394 = vld [vmem:[%s365 + $0x4] sm:$0x7]
      %v395 = vld [vmem:[%s365 + $0x14] sm:$0x7]
      %v396 = vld [vmem:[%s365 + $0x24] sm:$0x7]
      %v397 = vsel %vm151, %v394, -inf
      %v398 = vsel %vm151, %v395, -inf
      %v399 = vsel %vm151, %v396, -inf
      %v400 = vmax.f32 %v397, %v398
      %v401 = vmax.f32 %v400, %v399
      %v402 = vrot.slane %v401, 4
      %v403 = vmax.f32 %v401, %v402
      %v404 = vrot.slane %v403, 2
      %v405 = vmax.f32 %v403, %v404
      %v406 = vrot.slane %v405, 1
      %v407 = vmax.f32 %v405, %v406
      %v408 = vld [vmem:[%s365 + $0x6] sm:$0xf]
      %v409 = vld [vmem:[%s365 + $0x16] sm:$0xf]
      %v410 = vld [vmem:[%s365 + $0x26] sm:$0xf]
      %v411 = vsel %vm194, %v408, -inf
      %v412 = vsel %vm194, %v409, -inf
      %v413 = vsel %vm194, %v410, -inf
      %v414 = vmax.f32 %v411, %v412
      %v415 = vmax.f32 %v414, %v413
      %v416 = vrot.slane %v415, 4
      %v417 = vmax.f32 %v415, %v416
      %v418 = vrot.slane %v417, 2
      %v419 = vmax.f32 %v417, %v418
      %v420 = vrot.slane %v419, 1
      %v421 = vmax.f32 %v419, %v420
      %v422 = vld [vmem:[%s365 + $0x9] sm:$0x7]
      %v423 = vld [vmem:[%s365 + $0x19] sm:$0x7]
      %v424 = vld [vmem:[%s365 + $0x29] sm:$0x7]
      %v425 = vsel %vm151, %v422, -inf
      %v426 = vsel %vm151, %v423, -inf
      %v427 = vsel %vm151, %v424, -inf
      %v428 = vmax.f32 %v425, %v426
      %v429 = vmax.f32 %v428, %v427
      %v430 = vrot.slane %v429, 4
      %v431 = vmax.f32 %v429, %v430
      %v432 = vrot.slane %v431, 2
      %v433 = vmax.f32 %v431, %v432
      %v434 = vrot.slane %v433, 1
      %v435 = vmax.f32 %v433, %v434
      %v436 = vld [vmem:[%s365 + $0xb] sm:$0x7]
      %v437 = vld [vmem:[%s365 + $0x1b] sm:$0x7]
      %v438 = vld [vmem:[%s365 + $0x2b] sm:$0x7]
      %v439 = vsel %vm151, %v436, -inf
      %v440 = vsel %vm151, %v437, -inf
      %v441 = vsel %vm151, %v438, -inf
      %v442 = vmax.f32 %v439, %v440
      %v443 = vmax.f32 %v442, %v441
      %v444 = vrot.slane %v443, 4
      %v445 = vmax.f32 %v443, %v444
      %v446 = vrot.slane %v445, 2
      %v447 = vmax.f32 %v445, %v446
      %v448 = vrot.slane %v447, 1
      %v449 = vmax.f32 %v447, %v448
      %v450 = vld [vmem:[%s365 + $0xd] sm:$0x7]
      %v451 = vld [vmem:[%s365 + $0x1d] sm:$0x7]
      %v452 = vld [vmem:[%s365 + $0x2d] sm:$0x7]
      %v453 = vsel %vm151, %v450, -inf
      %v454 = vsel %vm151, %v451, -inf
      %v455 = vsel %vm151, %v452, -inf
      %v456 = vmax.f32 %v453, %v454
      %v457 = vmax.f32 %v456, %v455
      %v458 = vrot.slane %v457, 4
      %v459 = vmax.f32 %v457, %v458
      %v460 = vrot.slane %v459, 2
      %v461 = vmax.f32 %v459, %v460
      %v462 = vrot.slane %v461, 1
      %v463 = vmax.f32 %v461, %v462
      %v464 = vsel %vm248, %v379, %v393
      %v465 = vsel %vm250, %v464, %v407
      %v466 = vsel %vm252, %v465, %v421
      %v467 = vsel %vm254, %v466, %v435
      %v468 = vsel %vm256, %v467, %v449
      %v469 = vsel %vm258, %v468, %v463
      %s470 = scalar_lea.vmem %s139, 96
      %v471 = vld [vmem:[%s470] sm:$0x7]
      %v472 = vld [vmem:[%s470 + $0x10] sm:$0x7]
      %v473 = vld [vmem:[%s470 + $0x20] sm:$0x7]
      %v474 = vld [vmem:[%s470 + $0x30] sm:$0x7]
      %v475 = vsel %vm151, %v471, -inf
      %v476 = vsel %vm151, %v472, -inf
      %v477 = vsel %vm151, %v473, -inf
      %v478 = vsel %vm151, %v474, -inf
      %v479 = vmax.f32 %v475, %v476
      %v480 = vmax.f32 %v477, %v478
      %v481 = vmax.f32 %v479, %v480
      %v482 = vrot.slane %v481, 4
      %v483 = vmax.f32 %v481, %v482
      %v484 = vrot.slane %v483, 2
      %v485 = vmax.f32 %v483, %v484
      %v486 = vrot.slane %v485, 1
      %v487 = vmax.f32 %v485, %v486
      %v488 = vld [vmem:[%s470 + $0x2] sm:$0x7]
      %v489 = vld [vmem:[%s470 + $0x12] sm:$0x7]
      %v490 = vld [vmem:[%s470 + $0x22] sm:$0x7]
      %v491 = vld [vmem:[%s470 + $0x32] sm:$0x7]
      %v492 = vsel %vm151, %v488, -inf
      %v493 = vsel %vm151, %v489, -inf
      %v494 = vsel %vm151, %v490, -inf
      %v495 = vsel %vm151, %v491, -inf
      %v496 = vmax.f32 %v492, %v493
      %v497 = vmax.f32 %v494, %v495
      %v498 = vmax.f32 %v496, %v497
      %v499 = vrot.slane %v498, 4
      %v500 = vmax.f32 %v498, %v499
      %v501 = vrot.slane %v500, 2
      %v502 = vmax.f32 %v500, %v501
      %v503 = vrot.slane %v502, 1
      %v504 = vmax.f32 %v502, %v503
      %v505 = vld [vmem:[%s470 + $0x4] sm:$0x7]
      %v506 = vld [vmem:[%s470 + $0x14] sm:$0x7]
      %v507 = vld [vmem:[%s470 + $0x24] sm:$0x7]
      %v508 = vld [vmem:[%s470 + $0x34] sm:$0x7]
      %v509 = vsel %vm151, %v505, -inf
      %v510 = vsel %vm151, %v506, -inf
      %v511 = vsel %vm151, %v507, -inf
      %v512 = vsel %vm151, %v508, -inf
      %v513 = vmax.f32 %v509, %v510
      %v514 = vmax.f32 %v511, %v512
      %v515 = vmax.f32 %v513, %v514
      %v516 = vrot.slane %v515, 4
      %v517 = vmax.f32 %v515, %v516
      %v518 = vrot.slane %v517, 2
      %v519 = vmax.f32 %v517, %v518
      %v520 = vrot.slane %v519, 1
      %v521 = vmax.f32 %v519, %v520
      %v522 = vld [vmem:[%s470 + $0x6] sm:$0xf]
      %v523 = vld [vmem:[%s470 + $0x16] sm:$0xf]
      %v524 = vld [vmem:[%s470 + $0x26] sm:$0xf]
      %v525 = vld [vmem:[%s470 + $0x36] sm:$0xf]
      %v526 = vsel %vm194, %v522, -inf
      %v527 = vsel %vm194, %v523, -inf
      %v528 = vsel %vm194, %v524, -inf
      %v529 = vsel %vm194, %v525, -inf
      %v530 = vmax.f32 %v526, %v527
      %v531 = vmax.f32 %v528, %v529
      %v532 = vmax.f32 %v530, %v531
      %v533 = vrot.slane %v532, 4
      %v534 = vmax.f32 %v532, %v533
      %v535 = vrot.slane %v534, 2
      %v536 = vmax.f32 %v534, %v535
      %v537 = vrot.slane %v536, 1
      %v538 = vmax.f32 %v536, %v537
      %v539 = vld [vmem:[%s470 + $0x9] sm:$0x7]
      %v540 = vld [vmem:[%s470 + $0x19] sm:$0x7]
      %v541 = vld [vmem:[%s470 + $0x29] sm:$0x7]
      %v542 = vld [vmem:[%s470 + $0x39] sm:$0x7]
      %v543 = vsel %vm151, %v539, -inf
      %v544 = vsel %vm151, %v540, -inf
      %v545 = vsel %vm151, %v541, -inf
      %v546 = vsel %vm151, %v542, -inf
      %v547 = vmax.f32 %v543, %v544
      %v548 = vmax.f32 %v545, %v546
      %v549 = vmax.f32 %v547, %v548
      %v550 = vrot.slane %v549, 4
      %v551 = vmax.f32 %v549, %v550
      %v552 = vrot.slane %v551, 2
      %v553 = vmax.f32 %v551, %v552
      %v554 = vrot.slane %v553, 1
      %v555 = vmax.f32 %v553, %v554
      %v556 = vld [vmem:[%s470 + $0xb] sm:$0x7]
      %v557 = vld [vmem:[%s470 + $0x1b] sm:$0x7]
      %v558 = vld [vmem:[%s470 + $0x2b] sm:$0x7]
      %v559 = vld [vmem:[%s470 + $0x3b] sm:$0x7]
      %v560 = vsel %vm151, %v556, -inf
      %v561 = vsel %vm151, %v557, -inf
      %v562 = vsel %vm151, %v558, -inf
      %v563 = vsel %vm151, %v559, -inf
      %v564 = vmax.f32 %v560, %v561
      %v565 = vmax.f32 %v562, %v563
      %v566 = vmax.f32 %v564, %v565
      %v567 = vrot.slane %v566, 4
      %v568 = vmax.f32 %v566, %v567
      %v569 = vrot.slane %v568, 2
      %v570 = vmax.f32 %v568, %v569
      %v571 = vrot.slane %v570, 1
      %v572 = vmax.f32 %v570, %v571
      %v573 = vld [vmem:[%s470 + $0xd] sm:$0x7]
      %v574 = vld [vmem:[%s470 + $0x1d] sm:$0x7]
      %v575 = vld [vmem:[%s470 + $0x2d] sm:$0x7]
      %v576 = vld [vmem:[%s470 + $0x3d] sm:$0x7]
      %v577 = vsel %vm151, %v573, -inf
      %v578 = vsel %vm151, %v574, -inf
      %v579 = vsel %vm151, %v575, -inf
      %v580 = vsel %vm151, %v576, -inf
      %v581 = vmax.f32 %v577, %v578
      %v582 = vmax.f32 %v579, %v580
      %v583 = vmax.f32 %v581, %v582
      %v584 = vrot.slane %v583, 4
      %v585 = vmax.f32 %v583, %v584
      %v586 = vrot.slane %v585, 2
      %v587 = vmax.f32 %v585, %v586
      %v588 = vrot.slane %v587, 1
      %v589 = vmax.f32 %v587, %v588
      %v590 = vsel %vm248, %v487, %v504
      %v591 = vsel %vm250, %v590, %v521
      %v592 = vsel %vm252, %v591, %v538
      %v593 = vsel %vm254, %v592, %v555
      %v594 = vsel %vm256, %v593, %v572
      %v595 = vsel %vm258, %v594, %v589
      %s596 = scalar_lea.vmem %s139, 144
      %v597 = vld [vmem:[%s596] sm:$0x7]
      %v598 = vld [vmem:[%s596 + $0x10] sm:$0x7]
      %v599 = vld [vmem:[%s596 + $0x20] sm:$0x7]
      %v600 = vsel %vm151, %v597, -inf
      %v601 = vsel %vm151, %v598, -inf
      %v602 = vsel %vm151, %v599, -inf
      %v603 = vmax.f32 %v600, %v601
      %v604 = vmax.f32 %v603, %v602
      %v605 = vrot.slane %v604, 4
      %v606 = vmax.f32 %v604, %v605
      %v607 = vrot.slane %v606, 2
      %v608 = vmax.f32 %v606, %v607
      %v609 = vrot.slane %v608, 1
      %v610 = vmax.f32 %v608, %v609
      %v611 = vld [vmem:[%s596 + $0x2] sm:$0x7]
      %v612 = vld [vmem:[%s596 + $0x12] sm:$0x7]
      %v613 = vld [vmem:[%s596 + $0x22] sm:$0x7]
      %v614 = vsel %vm151, %v611, -inf
      %v615 = vsel %vm151, %v612, -inf
      %v616 = vsel %vm151, %v613, -inf
      %v617 = vmax.f32 %v614, %v615
      %v618 = vmax.f32 %v617, %v616
      %v619 = vrot.slane %v618, 4
      %v620 = vmax.f32 %v618, %v619
      %v621 = vrot.slane %v620, 2
      %v622 = vmax.f32 %v620, %v621
      %v623 = vrot.slane %v622, 1
      %v624 = vmax.f32 %v622, %v623
      %v625 = vld [vmem:[%s596 + $0x4] sm:$0x7]
      %v626 = vld [vmem:[%s596 + $0x14] sm:$0x7]
      %v627 = vld [vmem:[%s596 + $0x24] sm:$0x7]
      %v628 = vsel %vm151, %v625, -inf
      %v629 = vsel %vm151, %v626, -inf
      %v630 = vsel %vm151, %v627, -inf
      %v631 = vmax.f32 %v628, %v629
      %v632 = vmax.f32 %v631, %v630
      %v633 = vrot.slane %v632, 4
      %v634 = vmax.f32 %v632, %v633
      %v635 = vrot.slane %v634, 2
      %v636 = vmax.f32 %v634, %v635
      %v637 = vrot.slane %v636, 1
      %v638 = vmax.f32 %v636, %v637
      %v639 = vld [vmem:[%s596 + $0x6] sm:$0xf]
      %v640 = vld [vmem:[%s596 + $0x16] sm:$0xf]
      %v641 = vld [vmem:[%s596 + $0x26] sm:$0xf]
      %v642 = vsel %vm194, %v639, -inf
      %v643 = vsel %vm194, %v640, -inf
      %v644 = vsel %vm194, %v641, -inf
      %v645 = vmax.f32 %v642, %v643
      %v646 = vmax.f32 %v645, %v644
      %v647 = vrot.slane %v646, 4
      %v648 = vmax.f32 %v646, %v647
      %v649 = vrot.slane %v648, 2
      %v650 = vmax.f32 %v648, %v649
      %v651 = vrot.slane %v650, 1
      %v652 = vmax.f32 %v650, %v651
      %v653 = vld [vmem:[%s596 + $0x9] sm:$0x7]
      %v654 = vld [vmem:[%s596 + $0x19] sm:$0x7]
      %v655 = vld [vmem:[%s596 + $0x29] sm:$0x7]
      %v656 = vsel %vm151, %v653, -inf
      %v657 = vsel %vm151, %v654, -inf
      %v658 = vsel %vm151, %v655, -inf
      %v659 = vmax.f32 %v656, %v657
      %v660 = vmax.f32 %v659, %v658
      %v661 = vrot.slane %v660, 4
      %v662 = vmax.f32 %v660, %v661
      %v663 = vrot.slane %v662, 2
      %v664 = vmax.f32 %v662, %v663
      %v665 = vrot.slane %v664, 1
      %v666 = vmax.f32 %v664, %v665
      %v667 = vld [vmem:[%s596 + $0xb] sm:$0x7]
      %v668 = vld [vmem:[%s596 + $0x1b] sm:$0x7]
      %v669 = vld [vmem:[%s596 + $0x2b] sm:$0x7]
      %v670 = vsel %vm151, %v667, -inf
      %v671 = vsel %vm151, %v668, -inf
      %v672 = vsel %vm151, %v669, -inf
      %v673 = vmax.f32 %v670, %v671
      %v674 = vmax.f32 %v673, %v672
      %v675 = vrot.slane %v674, 4
      %v676 = vmax.f32 %v674, %v675
      %v677 = vrot.slane %v676, 2
      %v678 = vmax.f32 %v676, %v677
      %v679 = vrot.slane %v678, 1
      %v680 = vmax.f32 %v678, %v679
      %v681 = vld [vmem:[%s596 + $0xd] sm:$0x7]
      %v682 = vld [vmem:[%s596 + $0x1d] sm:$0x7]
      %v683 = vld [vmem:[%s596 + $0x2d] sm:$0x7]
      %v684 = vsel %vm151, %v681, -inf
      %v685 = vsel %vm151, %v682, -inf
      %v686 = vsel %vm151, %v683, -inf
      %v687 = vmax.f32 %v684, %v685
      %v688 = vmax.f32 %v687, %v686
      %v689 = vrot.slane %v688, 4
      %v690 = vmax.f32 %v688, %v689
      %v691 = vrot.slane %v690, 2
      %v692 = vmax.f32 %v690, %v691
      %v693 = vrot.slane %v692, 1
      %v694 = vmax.f32 %v692, %v693
      %v695 = vsel %vm248, %v610, %v624
      %v696 = vsel %vm250, %v695, %v638
      %v697 = vsel %vm252, %v696, %v652
      %v698 = vsel %vm254, %v697, %v666
      %v699 = vsel %vm256, %v698, %v680
      %v700 = vsel %vm258, %v699, %v694
      %s701 = scalar_lea.vmem %s139, 176
      %v702 = vld [vmem:[%s701] sm:$0x7]
      %v703 = vld [vmem:[%s701 + $0x10] sm:$0x7]
      %v704 = vld [vmem:[%s701 + $0x20] sm:$0x7]
      %v705 = vsel %vm151, %v702, -inf
      %v706 = vsel %vm151, %v703, -inf
      %v707 = vsel %vm151, %v704, -inf
      %v708 = vmax.f32 %v705, %v706
      %v709 = vmax.f32 %v708, %v707
      %v710 = vrot.slane %v709, 4
      %v711 = vmax.f32 %v709, %v710
      %v712 = vrot.slane %v711, 2
      %v713 = vmax.f32 %v711, %v712
      %v714 = vrot.slane %v713, 1
      %v715 = vmax.f32 %v713, %v714
      %v716 = vld [vmem:[%s701 + $0x2] sm:$0x7]
      %v717 = vld [vmem:[%s701 + $0x12] sm:$0x7]
      %v718 = vld [vmem:[%s701 + $0x22] sm:$0x7]
      %v719 = vsel %vm151, %v716, -inf
      %v720 = vsel %vm151, %v717, -inf
      %v721 = vsel %vm151, %v718, -inf
      %v722 = vmax.f32 %v719, %v720
      %v723 = vmax.f32 %v722, %v721
      %v724 = vrot.slane %v723, 4
      %v725 = vmax.f32 %v723, %v724
      %v726 = vrot.slane %v725, 2
      %v727 = vmax.f32 %v725, %v726
      %v728 = vrot.slane %v727, 1
      %v729 = vmax.f32 %v727, %v728
      %v730 = vld [vmem:[%s701 + $0x4] sm:$0x7]
      %v731 = vld [vmem:[%s701 + $0x14] sm:$0x7]
      %v732 = vld [vmem:[%s701 + $0x24] sm:$0x7]
      %v733 = vsel %vm151, %v730, -inf
      %v734 = vsel %vm151, %v731, -inf
      %v735 = vsel %vm151, %v732, -inf
      %v736 = vmax.f32 %v733, %v734
      %v737 = vmax.f32 %v736, %v735
      %v738 = vrot.slane %v737, 4
      %v739 = vmax.f32 %v737, %v738
      %v740 = vrot.slane %v739, 2
      %v741 = vmax.f32 %v739, %v740
      %v742 = vrot.slane %v741, 1
      %v743 = vmax.f32 %v741, %v742
      %v744 = vld [vmem:[%s701 + $0x6] sm:$0xf]
      %v745 = vld [vmem:[%s701 + $0x16] sm:$0xf]
      %v746 = vld [vmem:[%s701 + $0x26] sm:$0xf]
      %v747 = vsel %vm194, %v744, -inf
      %v748 = vsel %vm194, %v745, -inf
      %v749 = vsel %vm194, %v746, -inf
      %v750 = vmax.f32 %v747, %v748
      %v751 = vmax.f32 %v750, %v749
      %v752 = vrot.slane %v751, 4
      %v753 = vmax.f32 %v751, %v752
      %v754 = vrot.slane %v753, 2
      %v755 = vmax.f32 %v753, %v754
      %v756 = vrot.slane %v755, 1
      %v757 = vmax.f32 %v755, %v756
      %v758 = vld [vmem:[%s701 + $0x9] sm:$0x7]
      %v759 = vld [vmem:[%s701 + $0x19] sm:$0x7]
      %v760 = vld [vmem:[%s701 + $0x29] sm:$0x7]
      %v761 = vsel %vm151, %v758, -inf
      %v762 = vsel %vm151, %v759, -inf
      %v763 = vsel %vm151, %v760, -inf
      %v764 = vmax.f32 %v761, %v762
      %v765 = vmax.f32 %v764, %v763
      %v766 = vrot.slane %v765, 4
      %v767 = vmax.f32 %v765, %v766
      %v768 = vrot.slane %v767, 2
      %v769 = vmax.f32 %v767, %v768
      %v770 = vrot.slane %v769, 1
      %v771 = vmax.f32 %v769, %v770
      %v772 = vld [vmem:[%s701 + $0xb] sm:$0x7]
      %v773 = vld [vmem:[%s701 + $0x1b] sm:$0x7]
      %v774 = vld [vmem:[%s701 + $0x2b] sm:$0x7]
      %v775 = vsel %vm151, %v772, -inf
      %v776 = vsel %vm151, %v773, -inf
      %v777 = vsel %vm151, %v774, -inf
      %v778 = vmax.f32 %v775, %v776
      %v779 = vmax.f32 %v778, %v777
      %v780 = vrot.slane %v779, 4
      %v781 = vmax.f32 %v779, %v780
      %v782 = vrot.slane %v781, 2
      %v783 = vmax.f32 %v781, %v782
      %v784 = vrot.slane %v783, 1
      %v785 = vmax.f32 %v783, %v784
      %v786 = vld [vmem:[%s701 + $0xd] sm:$0x7]
      %v787 = vld [vmem:[%s701 + $0x1d] sm:$0x7]
      %v788 = vld [vmem:[%s701 + $0x2d] sm:$0x7]
      %v789 = vsel %vm151, %v786, -inf
      %v790 = vsel %vm151, %v787, -inf
      %v791 = vsel %vm151, %v788, -inf
      %v792 = vmax.f32 %v789, %v790
      %v793 = vmax.f32 %v792, %v791
      %v794 = vrot.slane %v793, 4
      %v795 = vmax.f32 %v793, %v794
      %v796 = vrot.slane %v795, 2
      %v797 = vmax.f32 %v795, %v796
      %v798 = vrot.slane %v797, 1
      %v799 = vmax.f32 %v797, %v798
      %v800 = vsel %vm248, %v715, %v729
      %v801 = vsel %vm250, %v800, %v743
      %v802 = vsel %vm252, %v801, %v757
      %v803 = vsel %vm254, %v802, %v771
      %v804 = vsel %vm256, %v803, %v785
      %v805 = vsel %vm258, %v804, %v799
      %s806 = scalar_lea.vmem %s139, 208
      %v807 = vld [vmem:[%s806] sm:$0x7]
      %v808 = vld [vmem:[%s806 + $0x10] sm:$0x7]
      %v809 = vld [vmem:[%s806 + $0x20] sm:$0x7]
      %v810 = vsel %vm151, %v807, -inf
      %v811 = vsel %vm151, %v808, -inf
      %v812 = vsel %vm151, %v809, -inf
      %v813 = vmax.f32 %v810, %v811
      %v814 = vmax.f32 %v813, %v812
      %v815 = vrot.slane %v814, 4
      %v816 = vmax.f32 %v814, %v815
      %v817 = vrot.slane %v816, 2
      %v818 = vmax.f32 %v816, %v817
      %v819 = vrot.slane %v818, 1
      %v820 = vmax.f32 %v818, %v819
      %v821 = vld [vmem:[%s806 + $0x2] sm:$0x7]
      %v822 = vld [vmem:[%s806 + $0x12] sm:$0x7]
      %v823 = vld [vmem:[%s806 + $0x22] sm:$0x7]
      %v824 = vsel %vm151, %v821, -inf
      %v825 = vsel %vm151, %v822, -inf
      %v826 = vsel %vm151, %v823, -inf
      %v827 = vmax.f32 %v824, %v825
      %v828 = vmax.f32 %v827, %v826
      %v829 = vrot.slane %v828, 4
      %v830 = vmax.f32 %v828, %v829
      %v831 = vrot.slane %v830, 2
      %v832 = vmax.f32 %v830, %v831
      %v833 = vrot.slane %v832, 1
      %v834 = vmax.f32 %v832, %v833
      %v835 = vld [vmem:[%s806 + $0x4] sm:$0x7]
      %v836 = vld [vmem:[%s806 + $0x14] sm:$0x7]
      %v837 = vld [vmem:[%s806 + $0x24] sm:$0x7]
      %v838 = vsel %vm151, %v835, -inf
      %v839 = vsel %vm151, %v836, -inf
      %v840 = vsel %vm151, %v837, -inf
      %v841 = vmax.f32 %v838, %v839
      %v842 = vmax.f32 %v841, %v840
      %v843 = vrot.slane %v842, 4
      %v844 = vmax.f32 %v842, %v843
      %v845 = vrot.slane %v844, 2
      %v846 = vmax.f32 %v844, %v845
      %v847 = vrot.slane %v846, 1
      %v848 = vmax.f32 %v846, %v847
      %v849 = vld [vmem:[%s806 + $0x6] sm:$0xf]
      %v850 = vld [vmem:[%s806 + $0x16] sm:$0xf]
      %v851 = vld [vmem:[%s806 + $0x26] sm:$0xf]
      %v852 = vsel %vm194, %v849, -inf
      %v853 = vsel %vm194, %v850, -inf
      %v854 = vsel %vm194, %v851, -inf
      %v855 = vmax.f32 %v852, %v853
      %v856 = vmax.f32 %v855, %v854
      %v857 = vrot.slane %v856, 4
      %v858 = vmax.f32 %v856, %v857
      %v859 = vrot.slane %v858, 2
      %v860 = vmax.f32 %v858, %v859
      %v861 = vrot.slane %v860, 1
      %v862 = vmax.f32 %v860, %v861
      %v863 = vld [vmem:[%s806 + $0x9] sm:$0x7]
      %v864 = vld [vmem:[%s806 + $0x19] sm:$0x7]
      %v865 = vld [vmem:[%s806 + $0x29] sm:$0x7]
      %v866 = vsel %vm151, %v863, -inf
      %v867 = vsel %vm151, %v864, -inf
      %v868 = vsel %vm151, %v865, -inf
      %v869 = vmax.f32 %v866, %v867
      %v870 = vmax.f32 %v869, %v868
      %v871 = vrot.slane %v870, 4
      %v872 = vmax.f32 %v870, %v871
      %v873 = vrot.slane %v872, 2
      %v874 = vmax.f32 %v872, %v873
      %v875 = vrot.slane %v874, 1
      %v876 = vmax.f32 %v874, %v875
      %v877 = vld [vmem:[%s806 + $0xb] sm:$0x7]
      %v878 = vld [vmem:[%s806 + $0x1b] sm:$0x7]
      %v879 = vld [vmem:[%s806 + $0x2b] sm:$0x7]
      %v880 = vsel %vm151, %v877, -inf
      %v881 = vsel %vm151, %v878, -inf
      %v882 = vsel %vm151, %v879, -inf
      %v883 = vmax.f32 %v880, %v881
      %v884 = vmax.f32 %v883, %v882
      %v885 = vrot.slane %v884, 4
      %v886 = vmax.f32 %v884, %v885
      %v887 = vrot.slane %v886, 2
      %v888 = vmax.f32 %v886, %v887
      %v889 = vrot.slane %v888, 1
      %v890 = vmax.f32 %v888, %v889
      %v891 = vld [vmem:[%s806 + $0xd] sm:$0x7]
      %v892 = vld [vmem:[%s806 + $0x1d] sm:$0x7]
      %v893 = vld [vmem:[%s806 + $0x2d] sm:$0x7]
      %v894 = vsel %vm151, %v891, -inf
      %v895 = vsel %vm151, %v892, -inf
      %v896 = vsel %vm151, %v893, -inf
      %v897 = vmax.f32 %v894, %v895
      %v898 = vmax.f32 %v897, %v896
      %v899 = vrot.slane %v898, 4
      %v900 = vmax.f32 %v898, %v899
      %v901 = vrot.slane %v900, 2
      %v902 = vmax.f32 %v900, %v901
      %v903 = vrot.slane %v902, 1
      %v904 = vmax.f32 %v902, %v903
      %v905 = vsel %vm248, %v820, %v834
      %v906 = vsel %vm250, %v905, %v848
      %v907 = vsel %vm252, %v906, %v862
      %v908 = vsel %vm254, %v907, %v876
      %v909 = vsel %vm256, %v908, %v890
      %v910 = vsel %vm258, %v909, %v904
      %vm911 = vcmask 30720
      %912 = vst.msk [vmem:[%s147] sm:$0x7f] %vm911, %v259
      %913 = vst.msk [vmem:[%s147 + $0x8] sm:$0x7f] %vm911, %v364
      %914 = vst.msk [vmem:[%s147 + $0x10] sm:$0x7f] %vm911, %v469
      %915 = vst.msk [vmem:[%s147 + $0x18] sm:$0x7f] %vm911, %v595
      %916 = vst.msk [vmem:[%s147 + $0x20] sm:$0x7f] %vm911, %v700
      %917 = vst.msk [vmem:[%s147 + $0x28] sm:$0x7f] %vm911, %v805
      %918 = vst.msk [vmem:[%s147 + $0x30] sm:$0x7f] %vm911, %v910
      %p919 = scmp.lt.s32.totalorder %s16, 1
      %s920 = scalar_select %p919, %s16, 1
      %p921 = scmp.lt.s32.totalorder %s17, 0
      %s922 = scalar_select %p921, %s17, 0
      %s923 = smul.addr %s920, 7
      %s924 = sadd.s32 %s922, %s923
      %s925 = smul.addr %s924, 8
      %s926 = scalar_lea.vmem %s1, %s925
      // Predicated region
      $region25: #{tpu_custom_call.1} parent=23 // pred_check
        %p927 = pneg %p72
      $region26: #{tpu_custom_call.1} parent=23 // pred_check_branch
        %929 = sbr.rel (%p927) target = $region28
      $region27: #{tpu_custom_call.1} parent=23 // pred_region
        _
      $region28: #{tpu_custom_call.1} parent=23 // pred_fallthru
        _
    $region24: #{tpu_custom_call.1} parent=5 // pred_fallthru
      _
    %p930 = scmp.le.s32.totalorder 2, %s7
    // Predicated region
    $region29: #{tpu_custom_call.1} parent=5 // pred_check
      %p931 = pneg %p930
    $region30: #{tpu_custom_call.1} parent=5 // pred_check_branch
      %933 = sbr.rel (%p931) target = $region32
    $region31: #{tpu_custom_call.1} parent=5 // pred_region
      %s934 = ssub.s32 %s7, 2
      // Predicated region
      $region33: #{tpu_custom_call.1} parent=31 // pred_check
        %p935 = pneg %p78
      $region34: #{tpu_custom_call.1} parent=31 // pred_check_branch
        %937 = sbr.rel (%p935) target = $region36
      $region35: #{tpu_custom_call.1} parent=31 // pred_region
        %p938 = scmp.lt.s32.totalorder %s18, 1
        %s939 = scalar_select %p938, %s18, 1
        %p940 = scmp.lt.s32.totalorder %s19, 0
        %s941 = scalar_select %p940, %s19, 0
        %s942 = smul.addr %s939, 7
        %s943 = sadd.s32 %s941, %s942
        %s944 = smul.addr %s943, 8
        %s945 = scalar_lea.vmem %s1, %s944
      $region36: #{tpu_custom_call.1} parent=31 // pred_fallthru
        _
    $region32: #{tpu_custom_call.1} parent=5 // pred_fallthru
      _
  $region6: #{tpu_custom_call.1} parent=0 // loop_footer
    %s11 = sadd.s32 1, %s7
  $region7: #{tpu_custom_call.1} parent=0 // loop_footer_branch
    %6 = sbr.rel target = $region3
  $region8: #{tpu_custom_call.1} parent=0 // loop_exit
    _

</llo_original>
